<compile_context>
chip_gen: v7x
topology: tpu7x:2x2x1
jax: 0.10.0
libtpu: 0.0.40
codegen_flags: <defaults>
</compile_context>

<pallas_src>
import functools

import jax
import jax.numpy as jnp
from jax.experimental import pallas as pl
from jax.experimental.pallas import tpu as pltpu

# ----------------------------- config ---------------------------------------
B = 2            # batch
N = 8            # max sentence length
DIM_WORD = 24
DIM_POS = 8
DIM_EMB = DIM_WORD + DIM_POS   # 32
HID = 32         # ARC_DIM == REL_DIM
NUM_REL = 8
VOCAB_WORD = 20
VOCAB_POS = 10
DROP_RATE = 0.1
ARC_RATE = 1.0
LABEL_RATE = 1.0
# div_way == 0  -> loss / (sum(L) - len(L))


# ----------------------------- fused kernel ---------------------------------
def _fused_parser_kernel(emb_ref, dmask_ref, w_all_ref, b_all_ref,
                         u_arc_ref, u_arc_b_ref, u_rel_ref, eye_tile_ref,
                         sel_ref, b_rel_ref, fa_ref, rel_ref, tmask_ref,
                         out_ref, *, batch, n_tok, hid, num_rel):
    m_rows = batch * n_tok

    # --- dropout (mask precomputed host-side, applied in-kernel) ---
    x = (emb_ref[...] * dmask_ref[...]).reshape(m_rows, -1)            # (M, E)

    # --- fused MLP projections: one (M,E)@(E,4H) MXU pass, 128-lane output ---
    proj = jnp.dot(x, w_all_ref[...], preferred_element_type=jnp.float32)
    proj = jnp.maximum(proj + b_all_ref[...], 0.0)                     # (M, 4H)
    dep_arc = proj[:, 0 * hid:1 * hid]
    head_arc = proj[:, 1 * hid:2 * hid]
    dep_rel = proj[:, 2 * hid:3 * hid]
    head_rel = proj[:, 3 * hid:4 * hid]

    # --- arc biaffine: s[b,i,j] = dep_i @ U @ head_j + u_b . head_j ---
    t_arc = jnp.dot(dep_arc, u_arc_ref[...], preferred_element_type=jnp.float32)
    t_arc = t_arc + u_arc_b_ref[...]                  # fold per-head bias
    s_arc = jnp.einsum('bie,bje->bij',
                       t_arc.reshape(batch, n_tok, hid),
                       head_arc.reshape(batch, n_tok, hid),
                       preferred_element_type=jnp.float32)             # (B,N,N)

    # log-softmax over heads (last axis)
    m1 = jnp.max(s_arc, axis=-1, keepdims=True)
    lse1 = jnp.log(jnp.sum(jnp.exp(s_arc - m1), axis=-1, keepdims=True))
    logp_arc = s_arc - m1 - lse1

    # one-hot over gold heads (reused for head gather below)
    head_iota = jax.lax.broadcasted_iota(jnp.int32, (batch, n_tok, n_tok), 2)
    onehot_fa = (head_iota == fa_ref[...][:, :, None]).astype(jnp.float32)

    tmask = tmask_ref[...]                                             # (B,N)
    picked_arc = jnp.sum(logp_arc * onehot_fa, axis=-1)                # (B,N)
    loss_arc = -jnp.sum(picked_arc * tmask)

    # --- label biaffine with gold heads ---
    # gather head_rel rows by gold heads via one-hot matmul (no dynamic gather)
    head_sel = jnp.einsum('bij,bjd->bid', onehot_fa,
                          head_rel.reshape(batch, n_tok, hid),
                          preferred_element_type=jnp.float32)          # (B,N,H)
    head_sel2 = head_sel.reshape(m_rows, hid)

    # s[m,r] = dep_m @ U_rel[r] @ head_m  via flattened (H, R*H) weight:
    #   t_rel[m, r*H+k]      = sum_d dep[m,d] * U_rel[r,d,k]
    #   head_tiled[m, r*H+k] = head[m,k]                (identity-tile matmul)
    #   s_rel = (t_rel * head_tiled) @ sel              (segment-sum matmul)
    t_rel = jnp.dot(dep_rel, u_rel_ref[...],
                    preferred_element_type=jnp.float32)                # (M, R*H)
    head_tiled = jnp.dot(head_sel2, eye_tile_ref[...],
                         preferred_element_type=jnp.float32)           # (M, R*H)
    s_rel = jnp.dot(t_rel * head_tiled, sel_ref[...],
                    preferred_element_type=jnp.float32)                # (M, R)
    s_rel = s_rel + b_rel_ref[...]

    # log-softmax over relations
    m2 = jnp.max(s_rel, axis=-1, keepdims=True)
    lse2 = jnp.log(jnp.sum(jnp.exp(s_rel - m2), axis=-1, keepdims=True))
    logp_rel = (s_rel - m2 - lse2).reshape(batch, n_tok, num_rel)

    rel_iota = jax.lax.broadcasted_iota(jnp.int32, (batch, n_tok, num_rel), 2)
    onehot_rel = (rel_iota == rel_ref[...][:, :, None]).astype(jnp.float32)
    picked_rel = jnp.sum(logp_rel * onehot_rel, axis=-1)               # (B,N)
    loss_label = -jnp.sum(picked_rel * tmask)

    out_ref[0, 0] = loss_arc
    out_ref[0, 1] = loss_label


def fused_parser_losses(emb, dmask, w_all, b_all, u_arc, u_arc_b,
                        u_rel_flat, eye_tile, sel, b_rel, fa, rel, tmask):
    batch, n_tok, _ = emb.shape
    hid = u_arc.shape[0]
    num_rel = b_rel.shape[1]
    kernel = functools.partial(_fused_parser_kernel, batch=batch, n_tok=n_tok,
                               hid=hid, num_rel=num_rel)
    vmem = pl.BlockSpec(memory_space=pltpu.MemorySpace.VMEM)
    out = pl.pallas_call(
        kernel,
        out_shape=jax.ShapeDtypeStruct((1, 2), jnp.float32),
        in_specs=[vmem] * 13,
        out_specs=pl.BlockSpec(memory_space=pltpu.MemorySpace.SMEM),
    )(emb, dmask, w_all, b_all, u_arc, u_arc_b, u_rel_flat, eye_tile, sel,
      b_rel, fa.astype(jnp.int32), rel.astype(jnp.int32), tmask)
    return out[0, 0], out[0, 1]


# ----------------------------- forward (glue + fused kernel) ----------------
def dependency_forward(params, word_ids, pos_ids, fa_pad, rel_pad, lens,
                       dropout_key):
    # --- embedding lookup + concat (glue) ---
    wemb = jnp.take(params["word_table"], word_ids, axis=0)            # (B,N,Dw)
    pemb = jnp.take(params["pos_table"], pos_ids, axis=0)              # (B,N,Dp)
    emb = jnp.concatenate([wemb, pemb], axis=-1)                       # (B,N,E)

    # --- dropout keep-mask (per-step key; applied inside the kernel) ---
    keep = jax.random.bernoulli(dropout_key, 1.0 - DROP_RATE, emb.shape)
    dmask = keep.astype(jnp.float32) / (1.0 - DROP_RATE)

    # --- parameter packing for the fused kernel (static transforms) ---
    w_all = jnp.concatenate([params["W_dep_arc"], params["W_head_arc"],
                             params["W_dep_rel"], params["W_head_rel"]], axis=1)
    b_all = jnp.concatenate([params["b_dep_arc"], params["b_head_arc"],
                             params["b_dep_rel"], params["b_head_rel"]], axis=1)
    r, h, _ = params["U_rel"].shape
    u_rel_flat = jnp.transpose(params["U_rel"], (1, 0, 2)).reshape(h, r * h)
    eye_tile = jnp.tile(jnp.eye(h, dtype=jnp.float32), (1, r))          # (H, R*H)
    sel = (jnp.arange(r * h)[:, None] // h
           == jnp.arange(r)[None, :]).astype(jnp.float32)               # (R*H, R)

    n_tok = emb.shape[1]
    # get_sum mask: tokens j < lens[b]-1
    tmask = (jnp.arange(n_tok)[None, :] < (lens[:, None] - 1)).astype(jnp.float32)

    loss_arc, loss_label = fused_parser_losses(
        emb, dmask, w_all, b_all, params["U_arc"], params["u_arc_bias"],
        u_rel_flat, eye_tile, sel, params["b_rel"], fa_pad, rel_pad, tmask)

    # div_way == 0
    denom = (jnp.sum(lens) - lens.shape[0]).astype(jnp.float32)
    return (loss_arc * ARC_RATE + loss_label * LABEL_RATE) / denom


# ----------------------------- main ------------------------------------------
if __name__ == "__main__":
    key = jax.random.PRNGKey(0)
    ks = jax.random.split(key, 16)

    params = {
        "word_table": 0.1 * jax.random.normal(ks[0], (VOCAB_WORD, DIM_WORD), jnp.float32),
        "pos_table": 0.1 * jax.random.normal(ks[1], (VOCAB_POS, DIM_POS), jnp.float32),
        "W_dep_arc": 0.1 * jax.random.normal(ks[2], (DIM_EMB, HID), jnp.float32),
        "b_dep_arc": jnp.zeros((1, HID), jnp.float32),
        "W_head_arc": 0.1 * jax.random.normal(ks[3], (DIM_EMB, HID), jnp.float32),
        "b_head_arc": jnp.zeros((1, HID), jnp.float32),
        "W_dep_rel": 0.1 * jax.random.normal(ks[4], (DIM_EMB, HID), jnp.float32),
        "b_dep_rel": jnp.zeros((1, HID), jnp.float32),
        "W_head_rel": 0.1 * jax.random.normal(ks[5], (DIM_EMB, HID), jnp.float32),
        "b_head_rel": jnp.zeros((1, HID), jnp.float32),
        "U_arc": 0.1 * jax.random.normal(ks[6], (HID, HID), jnp.float32),
        "u_arc_bias": 0.1 * jax.random.normal(ks[7], (1, HID), jnp.float32),
        "U_rel": 0.1 * jax.random.normal(ks[8], (NUM_REL, HID, HID), jnp.float32),
        "b_rel": 0.1 * jax.random.normal(ks[9], (1, NUM_REL), jnp.float32),
    }

    # synthetic batch (deterministic)
    lens = jnp.array([8, 6], dtype=jnp.int32)                     # sentence lengths
    word_ids = jax.random.randint(ks[10], (B, N), 0, VOCAB_WORD, jnp.int32)
    pos_ids = jax.random.randint(ks[11], (B, N), 0, VOCAB_POS, jnp.int32)
    # gold heads (valid only for j < lens[b]-1), padded with 0 -> pad_fa
    fa_raw = jax.random.randint(ks[12], (B, N), 0, N, jnp.int32)
    fa_pad = jnp.where(jnp.arange(N)[None, :] < (lens[:, None] - 1),
                       jnp.minimum(fa_raw, lens[:, None] - 1), 0).astype(jnp.int32)
    rel_raw = jax.random.randint(ks[13], (B, N), 0, NUM_REL, jnp.int32)
    rel_pad = jnp.where(jnp.arange(N)[None, :] < (lens[:, None] - 1),
                        rel_raw, 0).astype(jnp.int32)
    dropout_key = ks[14]

    fwd = jax.jit(dependency_forward)
    loss = fwd(params, word_ids, pos_ids, fa_pad, rel_pad, lens, dropout_key)
    loss = jax.block_until_ready(loss)
    assert jnp.isfinite(loss), "loss is not finite"
    print("KERNEL_OK")
</pallas_src>

<mosaic_0001>
module attributes {stable_mosaic.version = 11 : i64} {
  func.func @_fused_parser_kernel(%arg0: memref<2x8x32xf32, #tpu.memory_space<vmem>>, %arg1: memref<2x8x32xf32, #tpu.memory_space<vmem>>, %arg2: memref<32x128xf32, #tpu.memory_space<vmem>>, %arg3: memref<1x128xf32, #tpu.memory_space<vmem>>, %arg4: memref<32x32xf32, #tpu.memory_space<vmem>>, %arg5: memref<1x32xf32, #tpu.memory_space<vmem>>, %arg6: memref<32x256xf32, #tpu.memory_space<vmem>>, %arg7: memref<32x256xf32, #tpu.memory_space<vmem>>, %arg8: memref<256x8xf32, #tpu.memory_space<vmem>>, %arg9: memref<1x8xf32, #tpu.memory_space<vmem>>, %arg10: memref<2x8xi32, #tpu.memory_space<vmem>>, %arg11: memref<2x8xi32, #tpu.memory_space<vmem>>, %arg12: memref<2x8xf32, #tpu.memory_space<vmem>>, %arg13: memref<1x2xf32, #tpu.memory_space<smem>>) attributes {dimension_semantics = [], scalar_prefetch = 0 : i64, scratch_operands = 0 : i64, tpu.core_type = #tpu.core_type<tc>} {
    %c0 = arith.constant 0 : index
    %c0_0 = arith.constant 0 : index
    %c0_1 = arith.constant 0 : index
    %0 = vector.load %arg0[%c0, %c0_0, %c0_1] : memref<2x8x32xf32, #tpu.memory_space<vmem>>, vector<2x8x32xf32>
    %c0_2 = arith.constant 0 : index
    %c0_3 = arith.constant 0 : index
    %c0_4 = arith.constant 0 : index
    %1 = vector.load %arg1[%c0_2, %c0_3, %c0_4] : memref<2x8x32xf32, #tpu.memory_space<vmem>>, vector<2x8x32xf32>
    %2 = arith.mulf %0, %1 : vector<2x8x32xf32>
    %3 = vector.shape_cast %2 : vector<2x8x32xf32> to vector<16x32xf32>
    %c0_5 = arith.constant 0 : index
    %c0_6 = arith.constant 0 : index
    %4 = vector.load %arg2[%c0_5, %c0_6] : memref<32x128xf32, #tpu.memory_space<vmem>>, vector<32x128xf32>
    %cst = arith.constant dense<0.000000e+00> : vector<16x128xf32>
    %5 = tpu.matmul %3, %4, %cst {dimension_numbers = #tpu.dot_dimension_numbers<[1], [0], [0], [1], [0, 0, 1, 1], [], []>} : vector<16x32xf32>, vector<32x128xf32>, vector<16x128xf32> -> vector<16x128xf32>
    %c0_7 = arith.constant 0 : index
    %c0_8 = arith.constant 0 : index
    %6 = vector.load %arg3[%c0_7, %c0_8] : memref<1x128xf32, #tpu.memory_space<vmem>>, vector<1x128xf32>
    %7 = vector.broadcast %6 : vector<1x128xf32> to vector<16x128xf32>
    %8 = arith.addf %5, %7 : vector<16x128xf32>
    %cst_9 = arith.constant 0.000000e+00 : f32
    %9 = vector.broadcast %cst_9 : f32 to vector<16x128xf32>
    %10 = arith.maximumf %8, %9 : vector<16x128xf32>
    %11 = vector.extract_strided_slice %10 {offsets = [0, 0], sizes = [16, 32], strides = [1, 1]} : vector<16x128xf32> to vector<16x32xf32>
    %12 = vector.extract_strided_slice %10 {offsets = [0, 32], sizes = [16, 32], strides = [1, 1]} : vector<16x128xf32> to vector<16x32xf32>
    %13 = vector.extract_strided_slice %10 {offsets = [0, 64], sizes = [16, 32], strides = [1, 1]} : vector<16x128xf32> to vector<16x32xf32>
    %14 = vector.extract_strided_slice %10 {offsets = [0, 96], sizes = [16, 32], strides = [1, 1]} : vector<16x128xf32> to vector<16x32xf32>
    %c0_10 = arith.constant 0 : index
    %c0_11 = arith.constant 0 : index
    %15 = vector.load %arg4[%c0_10, %c0_11] : memref<32x32xf32, #tpu.memory_space<vmem>>, vector<32x32xf32>
    %cst_12 = arith.constant dense<0.000000e+00> : vector<16x32xf32>
    %16 = tpu.matmul %11, %15, %cst_12 {dimension_numbers = #tpu.dot_dimension_numbers<[1], [0], [0], [1], [0, 0, 1, 1], [], []>} : vector<16x32xf32>, vector<32x32xf32>, vector<16x32xf32> -> vector<16x32xf32>
    %c0_13 = arith.constant 0 : index
    %c0_14 = arith.constant 0 : index
    %17 = vector.load %arg5[%c0_13, %c0_14] : memref<1x32xf32, #tpu.memory_space<vmem>>, vector<1x32xf32>
    %18 = vector.broadcast %17 : vector<1x32xf32> to vector<16x32xf32>
    %19 = arith.addf %16, %18 : vector<16x32xf32>
    %20 = vector.shape_cast %19 : vector<16x32xf32> to vector<2x8x32xf32>
    %21 = vector.shape_cast %12 : vector<16x32xf32> to vector<2x8x32xf32>
    "tpu.trace_start"() <{level = 10 : i32, message = "bie,bje->bij"}> : () -> ()
    %cst_15 = arith.constant dense<0.000000e+00> : vector<2x8x8xf32>
    %22 = tpu.matmul %20, %21, %cst_15 {dimension_numbers = #tpu.dot_dimension_numbers<[2], [2], [1], [1], [0, 0, 0, 1, 1, 1], [0], [0]>} : vector<2x8x32xf32>, vector<2x8x32xf32>, vector<2x8x8xf32> -> vector<2x8x8xf32>
    "tpu.trace_stop"() : () -> ()
    %cst_16 = arith.constant dense<0xFF800000> : vector<2x8xf32>
    %23 = vector.multi_reduction <maximumf>, %22, %cst_16 [2] : vector<2x8x8xf32> to vector<2x8xf32>
    %24 = vector.shape_cast %23 : vector<2x8xf32> to vector<2x8x1xf32>
    %25 = vector.broadcast %24 : vector<2x8x1xf32> to vector<2x8x8xf32>
    %26 = arith.subf %22, %25 : vector<2x8x8xf32>
    %27 = math.exp %26 : vector<2x8x8xf32>
    %cst_17 = arith.constant dense<0.000000e+00> : vector<2x8xf32>
    %28 = vector.multi_reduction <add>, %27, %cst_17 [2] : vector<2x8x8xf32> to vector<2x8xf32>
    %29 = vector.shape_cast %28 : vector<2x8xf32> to vector<2x8x1xf32>
    %30 = math.log %29 : vector<2x8x1xf32>
    %31 = vector.broadcast %24 : vector<2x8x1xf32> to vector<2x8x8xf32>
    %32 = arith.subf %22, %31 : vector<2x8x8xf32>
    %33 = vector.broadcast %30 : vector<2x8x1xf32> to vector<2x8x8xf32>
    %34 = arith.subf %32, %33 : vector<2x8x8xf32>
    %35 = tpu.iota {dimensions = array<i32: 2>} : vector<2x8x8xi32>
    %c0_18 = arith.constant 0 : index
    %c0_19 = arith.constant 0 : index
    %36 = vector.load %arg10[%c0_18, %c0_19] : memref<2x8xi32, #tpu.memory_space<vmem>>, vector<2x8xi32>
    %37 = vector.shape_cast %36 : vector<2x8xi32> to vector<2x8x1xi32>
    %38 = vector.broadcast %37 : vector<2x8x1xi32> to vector<2x8x8xi32>
    %39 = arith.cmpi eq, %35, %38 : vector<2x8x8xi32>
    %40 = arith.extui %39 : vector<2x8x8xi1> to vector<2x8x8xi32>
    %41 = arith.sitofp %40 : vector<2x8x8xi32> to vector<2x8x8xf32>
    %c0_20 = arith.constant 0 : index
    %c0_21 = arith.constant 0 : index
    %42 = vector.load %arg12[%c0_20, %c0_21] : memref<2x8xf32, #tpu.memory_space<vmem>>, vector<2x8xf32>
    %43 = arith.mulf %34, %41 : vector<2x8x8xf32>
    %cst_22 = arith.constant dense<0.000000e+00> : vector<2x8xf32>
    %44 = vector.multi_reduction <add>, %43, %cst_22 [2] : vector<2x8x8xf32> to vector<2x8xf32>
    %45 = arith.mulf %44, %42 : vector<2x8xf32>
    %46 = vector.shape_cast %45 : vector<2x8xf32> to vector<1x2x8xf32>
    %cst_23 = arith.constant dense<0.000000e+00> : vector<1xf32>
    %47 = vector.multi_reduction <add>, %46, %cst_23 [1, 2] : vector<1x2x8xf32> to vector<1xf32>
    %48 = vector.shape_cast %47 : vector<1xf32> to vector<1x1x1xf32>
    %49 = vector.extract %48[0, 0, 0] : f32 from vector<1x1x1xf32>
    %cst_24 = arith.constant 0.000000e+00 : f32
    %50 = arith.subf %cst_24, %49 : f32
    %51 = vector.shape_cast %14 : vector<16x32xf32> to vector<2x8x32xf32>
    "tpu.trace_start"() <{level = 10 : i32, message = "bij,bjd->bid"}> : () -> ()
    %cst_25 = arith.constant dense<0.000000e+00> : vector<2x8x32xf32>
    %52 = tpu.matmul %41, %51, %cst_25 {dimension_numbers = #tpu.dot_dimension_numbers<[2], [1], [1], [2], [0, 0, 0, 1, 1, 2], [0], [0]>} : vector<2x8x8xf32>, vector<2x8x32xf32>, vector<2x8x32xf32> -> vector<2x8x32xf32>
    "tpu.trace_stop"() : () -> ()
    %53 = vector.shape_cast %52 : vector<2x8x32xf32> to vector<16x32xf32>
    %c0_26 = arith.constant 0 : index
    %c0_27 = arith.constant 0 : index
    %54 = vector.load %arg6[%c0_26, %c0_27] : memref<32x256xf32, #tpu.memory_space<vmem>>, vector<32x256xf32>
    %cst_28 = arith.constant dense<0.000000e+00> : vector<16x256xf32>
    %55 = tpu.matmul %13, %54, %cst_28 {dimension_numbers = #tpu.dot_dimension_numbers<[1], [0], [0], [1], [0, 0, 1, 1], [], []>} : vector<16x32xf32>, vector<32x256xf32>, vector<16x256xf32> -> vector<16x256xf32>
    %c0_29 = arith.constant 0 : index
    %c0_30 = arith.constant 0 : index
    %56 = vector.load %arg7[%c0_29, %c0_30] : memref<32x256xf32, #tpu.memory_space<vmem>>, vector<32x256xf32>
    %cst_31 = arith.constant dense<0.000000e+00> : vector<16x256xf32>
    %57 = tpu.matmul %53, %56, %cst_31 {dimension_numbers = #tpu.dot_dimension_numbers<[1], [0], [0], [1], [0, 0, 1, 1], [], []>} : vector<16x32xf32>, vector<32x256xf32>, vector<16x256xf32> -> vector<16x256xf32>
    %58 = arith.mulf %55, %57 : vector<16x256xf32>
    %c0_32 = arith.constant 0 : index
    %c0_33 = arith.constant 0 : index
    %59 = vector.load %arg8[%c0_32, %c0_33] : memref<256x8xf32, #tpu.memory_space<vmem>>, vector<256x8xf32>
    %cst_34 = arith.constant dense<0.000000e+00> : vector<16x8xf32>
    %60 = tpu.matmul %58, %59, %cst_34 {dimension_numbers = #tpu.dot_dimension_numbers<[1], [0], [0], [1], [0, 0, 1, 1], [], []>} : vector<16x256xf32>, vector<256x8xf32>, vector<16x8xf32> -> vector<16x8xf32>
    %c0_35 = arith.constant 0 : index
    %c0_36 = arith.constant 0 : index
    %61 = vector.load %arg9[%c0_35, %c0_36] : memref<1x8xf32, #tpu.memory_space<vmem>>, vector<1x8xf32>
    %62 = vector.broadcast %61 : vector<1x8xf32> to vector<16x8xf32>
    %63 = arith.addf %60, %62 : vector<16x8xf32>
    %cst_37 = arith.constant dense<0xFF800000> : vector<16xf32>
    %64 = vector.multi_reduction <maximumf>, %63, %cst_37 [1] : vector<16x8xf32> to vector<16xf32>
    %65 = vector.shape_cast %64 : vector<16xf32> to vector<16x1xf32>
    %66 = vector.broadcast %65 : vector<16x1xf32> to vector<16x8xf32>
    %67 = arith.subf %63, %66 : vector<16x8xf32>
    %68 = math.exp %67 : vector<16x8xf32>
    %cst_38 = arith.constant dense<0.000000e+00> : vector<16xf32>
    %69 = vector.multi_reduction <add>, %68, %cst_38 [1] : vector<16x8xf32> to vector<16xf32>
    %70 = vector.shape_cast %69 : vector<16xf32> to vector<16x1xf32>
    %71 = math.log %70 : vector<16x1xf32>
    %72 = vector.broadcast %65 : vector<16x1xf32> to vector<16x8xf32>
    %73 = arith.subf %63, %72 : vector<16x8xf32>
    %74 = vector.broadcast %71 : vector<16x1xf32> to vector<16x8xf32>
    %75 = arith.subf %73, %74 : vector<16x8xf32>
    %76 = vector.shape_cast %75 : vector<16x8xf32> to vector<2x8x8xf32>
    %77 = tpu.iota {dimensions = array<i32: 2>} : vector<2x8x8xi32>
    %c0_39 = arith.constant 0 : index
    %c0_40 = arith.constant 0 : index
    %78 = vector.load %arg11[%c0_39, %c0_40] : memref<2x8xi32, #tpu.memory_space<vmem>>, vector<2x8xi32>
    %79 = vector.shape_cast %78 : vector<2x8xi32> to vector<2x8x1xi32>
    %80 = vector.broadcast %79 : vector<2x8x1xi32> to vector<2x8x8xi32>
    %81 = arith.cmpi eq, %77, %80 : vector<2x8x8xi32>
    %82 = arith.extui %81 : vector<2x8x8xi1> to vector<2x8x8xi32>
    %83 = arith.sitofp %82 : vector<2x8x8xi32> to vector<2x8x8xf32>
    %84 = arith.mulf %76, %83 : vector<2x8x8xf32>
    %cst_41 = arith.constant dense<0.000000e+00> : vector<2x8xf32>
    %85 = vector.multi_reduction <add>, %84, %cst_41 [2] : vector<2x8x8xf32> to vector<2x8xf32>
    %86 = arith.mulf %85, %42 : vector<2x8xf32>
    %87 = vector.shape_cast %86 : vector<2x8xf32> to vector<1x2x8xf32>
    %cst_42 = arith.constant dense<0.000000e+00> : vector<1xf32>
    %88 = vector.multi_reduction <add>, %87, %cst_42 [1, 2] : vector<1x2x8xf32> to vector<1xf32>
    %89 = vector.shape_cast %88 : vector<1xf32> to vector<1x1x1xf32>
    %90 = vector.extract %89[0, 0, 0] : f32 from vector<1x1x1xf32>
    %cst_43 = arith.constant 0.000000e+00 : f32
    %91 = arith.subf %cst_43, %90 : f32
    %c0_44 = arith.constant 0 : index
    %c0_45 = arith.constant 0 : index
    %92 = memref.load %arg13[%c0_44, %c0_45] : memref<1x2xf32, #tpu.memory_space<smem>>
    memref.store %50, %arg13[%c0_44, %c0_45] : memref<1x2xf32, #tpu.memory_space<smem>>
    %c0_46 = arith.constant 0 : index
    %c1 = arith.constant 1 : index
    %93 = memref.load %arg13[%c0_46, %c1] : memref<1x2xf32, #tpu.memory_space<smem>>
    memref.store %91, %arg13[%c0_46, %c1] : memref<1x2xf32, #tpu.memory_space<smem>>
    return
  }
}

</mosaic_0001>

<llo_original>
// kernel: tile.9
$region0: #{tile.9}
  %s0 = inlined_call_operand.vmem [shape: f32[32,8,32], index: 0, kind: input, shape index: {}]
  %s1 = inlined_call_operand.vmem [shape: f32[32,256], index: 1, kind: output, shape index: {}]
  %v2 = vld [vmem:[%s0] ss:$4 sm:$0xff]
  %vm3 = vcmask 261120
  %4 = vst.msk [vmem:[%s1] ss:$8 sm:$0x3] %vm3, %v2
  %s5 = scalar_lea.vmem %s1, 4294967281
  %6 = vst.msk [vmem:[%s5] ss:$8 sm:$0xc] %vm3, %v2
  %s7 = scalar_lea.vmem %s1, 4294967266
  %8 = vst.msk [vmem:[%s7] ss:$8 sm:$0x30] %vm3, %v2
  %s9 = scalar_lea.vmem %s1, 4294967251
  %10 = vst.msk [vmem:[%s9] ss:$8 sm:$0xc0] %vm3, %v2
  %s11 = scalar_lea.vmem %s0, 32
  %v12 = vld [vmem:[%s11] ss:$4 sm:$0xff]
  %vm13 = vcmask 261120
  %s14 = scalar_lea.vmem %s1, 4
  %15 = vst.msk [vmem:[%s14] ss:$8 sm:$0x3] %vm13, %v12
  %s16 = scalar_lea.vmem %s1, 4294967285
  %17 = vst.msk [vmem:[%s16] ss:$8 sm:$0xc] %vm13, %v12
  %s18 = scalar_lea.vmem %s1, 4294967270
  %19 = vst.msk [vmem:[%s18] ss:$8 sm:$0x30] %vm13, %v12
  %s20 = scalar_lea.vmem %s1, 4294967255
  %21 = vst.msk [vmem:[%s20] ss:$8 sm:$0xc0] %vm13, %v12
  %s22 = scalar_lea.vmem %s0, 64
  %v23 = vld [vmem:[%s22] ss:$4 sm:$0xff]
  %vm24 = vcmask 261120
  %s25 = scalar_lea.vmem %s1, 16
  %26 = vst.msk [vmem:[%s25] ss:$8 sm:$0x3] %vm24, %v23
  %s27 = scalar_lea.vmem %s1, 1
  %28 = vst.msk [vmem:[%s27] ss:$8 sm:$0xc] %vm24, %v23
  %s29 = scalar_lea.vmem %s1, 4294967282
  %30 = vst.msk [vmem:[%s29] ss:$8 sm:$0x30] %vm24, %v23
  %s31 = scalar_lea.vmem %s1, 4294967267
  %32 = vst.msk [vmem:[%s31] ss:$8 sm:$0xc0] %vm24, %v23
  %s33 = scalar_lea.vmem %s0, 96
  %v34 = vld [vmem:[%s33] ss:$4 sm:$0xff]
  %vm35 = vcmask 261120
  %s36 = scalar_lea.vmem %s1, 20
  %37 = vst.msk [vmem:[%s36] ss:$8 sm:$0x3] %vm35, %v34
  %s38 = scalar_lea.vmem %s1, 5
  %39 = vst.msk [vmem:[%s38] ss:$8 sm:$0xc] %vm35, %v34
  %s40 = scalar_lea.vmem %s1, 4294967286
  %41 = vst.msk [vmem:[%s40] ss:$8 sm:$0x30] %vm35, %v34
  %s42 = scalar_lea.vmem %s1, 4294967271
  %43 = vst.msk [vmem:[%s42] ss:$8 sm:$0xc0] %vm35, %v34
  %s44 = scalar_lea.vmem %s0, 128
  %v45 = vld [vmem:[%s44] ss:$4 sm:$0xff]
  %vm46 = vcmask 261120
  %s47 = scalar_lea.vmem %s1, 32
  %48 = vst.msk [vmem:[%s47] ss:$8 sm:$0x3] %vm46, %v45
  %s49 = scalar_lea.vmem %s1, 17
  %50 = vst.msk [vmem:[%s49] ss:$8 sm:$0xc] %vm46, %v45
  %s51 = scalar_lea.vmem %s1, 2
  %52 = vst.msk [vmem:[%s51] ss:$8 sm:$0x30] %vm46, %v45
  %s53 = scalar_lea.vmem %s1, 4294967283
  %54 = vst.msk [vmem:[%s53] ss:$8 sm:$0xc0] %vm46, %v45
  %s55 = scalar_lea.vmem %s0, 160
  %v56 = vld [vmem:[%s55] ss:$4 sm:$0xff]
  %vm57 = vcmask 261120
  %s58 = scalar_lea.vmem %s1, 36
  %59 = vst.msk [vmem:[%s58] ss:$8 sm:$0x3] %vm57, %v56
  %s60 = scalar_lea.vmem %s1, 21
  %61 = vst.msk [vmem:[%s60] ss:$8 sm:$0xc] %vm57, %v56
  %s62 = scalar_lea.vmem %s1, 6
  %63 = vst.msk [vmem:[%s62] ss:$8 sm:$0x30] %vm57, %v56
  %s64 = scalar_lea.vmem %s1, 4294967287
  %65 = vst.msk [vmem:[%s64] ss:$8 sm:$0xc0] %vm57, %v56
  %s66 = scalar_lea.vmem %s0, 192
  %v67 = vld [vmem:[%s66] ss:$4 sm:$0xff]
  %vm68 = vcmask 261120
  %s69 = scalar_lea.vmem %s1, 48
  %70 = vst.msk [vmem:[%s69] ss:$8 sm:$0x3] %vm68, %v67
  %s71 = scalar_lea.vmem %s1, 33
  %72 = vst.msk [vmem:[%s71] ss:$8 sm:$0xc] %vm68, %v67
  %s73 = scalar_lea.vmem %s1, 18
  %74 = vst.msk [vmem:[%s73] ss:$8 sm:$0x30] %vm68, %v67
  %s75 = scalar_lea.vmem %s1, 3
  %76 = vst.msk [vmem:[%s75] ss:$8 sm:$0xc0] %vm68, %v67
  %s77 = scalar_lea.vmem %s0, 224
  %v78 = vld [vmem:[%s77] ss:$4 sm:$0xff]
  %vm79 = vcmask 261120
  %s80 = scalar_lea.vmem %s1, 52
  %81 = vst.msk [vmem:[%s80] ss:$8 sm:$0x3] %vm79, %v78
  %s82 = scalar_lea.vmem %s1, 37
  %83 = vst.msk [vmem:[%s82] ss:$8 sm:$0xc] %vm79, %v78
  %s84 = scalar_lea.vmem %s1, 22
  %85 = vst.msk [vmem:[%s84] ss:$8 sm:$0x30] %vm79, %v78
  %s86 = scalar_lea.vmem %s1, 7
  %87 = vst.msk [vmem:[%s86] ss:$8 sm:$0xc0] %vm79, %v78
  %s88 = scalar_lea.vmem %s0, 3
  %v89 = vld [vmem:[%s88] ss:$8 sm:$0xf]
  %s90 = scalar_lea.vmem %s0, 3
  %v91 = vld [vmem:[%s90] ss:$8 sm:$0xf0]
  %vm92 = vcmask 1047556
  %v93 = vsel %vm92, %v91, %v89
  %94 = vrot.lane.b32.xlu0 %v93, 96
  %v95 = vpop.permute.xlu0 %94
  %vm96 = vcmask 1048320
  %97 = vst.msk [vmem:[%s1] sm:$0xff] %vm96, %v95
  %s98 = scalar_lea.vmem %s0, 131
  %v99 = vld [vmem:[%s98] ss:$8 sm:$0xf]
  %s100 = scalar_lea.vmem %s0, 131
  %v101 = vld [vmem:[%s100] ss:$8 sm:$0xf0]
  %vm102 = vcmask 1047556
  %v103 = vsel %vm102, %v101, %v99
  %104 = vrot.lane.b32.xlu0 %v103, 96
  %v105 = vpop.permute.xlu0 %104
  %vm106 = vcmask 1048320
  %s107 = scalar_lea.vmem %s1, 32
  %108 = vst.msk [vmem:[%s107] sm:$0xff] %vm106, %v105
  %s109 = scalar_lea.vmem %s0, 7
  %v110 = vld [vmem:[%s109] ss:$8 sm:$0xf]
  %s111 = scalar_lea.vmem %s0, 7
  %v112 = vld [vmem:[%s111] ss:$8 sm:$0xf0]
  %vm113 = vcmask 1047556
  %v114 = vsel %vm113, %v112, %v110
  %115 = vrot.lane.b32.xlu0 %v114, 96
  %v116 = vpop.permute.xlu0 %115
  %vm117 = vcmask 1048320
  %s118 = scalar_lea.vmem %s1, 8
  %119 = vst.msk [vmem:[%s118] sm:$0xff] %vm117, %v116
  %s120 = scalar_lea.vmem %s0, 135
  %v121 = vld [vmem:[%s120] ss:$8 sm:$0xf]
  %s122 = scalar_lea.vmem %s0, 135
  %v123 = vld [vmem:[%s122] ss:$8 sm:$0xf0]
  %vm124 = vcmask 1047556
  %v125 = vsel %vm124, %v123, %v121
  %126 = vrot.lane.b32.xlu0 %v125, 96
  %v127 = vpop.permute.xlu0 %126
  %vm128 = vcmask 1048320
  %s129 = scalar_lea.vmem %s1, 40
  %130 = vst.msk [vmem:[%s129] sm:$0xff] %vm128, %v127
  %s131 = scalar_lea.vmem %s0, 67
  %v132 = vld [vmem:[%s131] ss:$8 sm:$0xf]
  %s133 = scalar_lea.vmem %s0, 67
  %v134 = vld [vmem:[%s133] ss:$8 sm:$0xf0]
  %vm135 = vcmask 1047556
  %v136 = vsel %vm135, %v134, %v132
  %137 = vrot.lane.b32.xlu0 %v136, 96
  %v138 = vpop.permute.xlu0 %137
  %vm139 = vcmask 1048320
  %s140 = scalar_lea.vmem %s1, 16
  %141 = vst.msk [vmem:[%s140] sm:$0xff] %vm139, %v138
  %s142 = scalar_lea.vmem %s0, 195
  %v143 = vld [vmem:[%s142] ss:$8 sm:$0xf]
  %s144 = scalar_lea.vmem %s0, 195
  %v145 = vld [vmem:[%s144] ss:$8 sm:$0xf0]
  %vm146 = vcmask 1047556
  %v147 = vsel %vm146, %v145, %v143
  %148 = vrot.lane.b32.xlu0 %v147, 96
  %v149 = vpop.permute.xlu0 %148
  %vm150 = vcmask 1048320
  %s151 = scalar_lea.vmem %s1, 48
  %152 = vst.msk [vmem:[%s151] sm:$0xff] %vm150, %v149
  %s153 = scalar_lea.vmem %s0, 71
  %v154 = vld [vmem:[%s153] ss:$8 sm:$0xf]
  %s155 = scalar_lea.vmem %s0, 71
  %v156 = vld [vmem:[%s155] ss:$8 sm:$0xf0]
  %vm157 = vcmask 1047556
  %v158 = vsel %vm157, %v156, %v154
  %159 = vrot.lane.b32.xlu0 %v158, 96
  %v160 = vpop.permute.xlu0 %159
  %vm161 = vcmask 1048320
  %s162 = scalar_lea.vmem %s1, 24
  %163 = vst.msk [vmem:[%s162] sm:$0xff] %vm161, %v160
  %s164 = scalar_lea.vmem %s0, 199
  %v165 = vld [vmem:[%s164] ss:$8 sm:$0xf]
  %s166 = scalar_lea.vmem %s0, 199
  %v167 = vld [vmem:[%s166] ss:$8 sm:$0xf0]
  %vm168 = vcmask 1047556
  %v169 = vsel %vm168, %v167, %v165
  %170 = vrot.lane.b32.xlu0 %v169, 96
  %v171 = vpop.permute.xlu0 %170
  %vm172 = vcmask 1048320
  %s173 = scalar_lea.vmem %s1, 56
  %174 = vst.msk [vmem:[%s173] sm:$0xff] %vm172, %v171
  %s175 = scalar_lea.vmem %s0, 2
  %v176 = vld [vmem:[%s175] ss:$8 sm:$0xf]
  %s177 = scalar_lea.vmem %s0, 2
  %v178 = vld [vmem:[%s177] ss:$8 sm:$0xf0]
  %vm179 = vcmask 1047556
  %v180 = vsel %vm179, %v178, %v176
  %181 = vrot.lane.b32.xlu0 %v180, 64
  %v182 = vpop.permute.xlu0 %181
  %vm183 = vcmask 785920
  %184 = vst.msk [vmem:[%s1] sm:$0xff] %vm183, %v182
  %s185 = scalar_lea.vmem %s0, 130
  %v186 = vld [vmem:[%s185] ss:$8 sm:$0xf]
  %s187 = scalar_lea.vmem %s0, 130
  %v188 = vld [vmem:[%s187] ss:$8 sm:$0xf0]
  %vm189 = vcmask 1047556
  %v190 = vsel %vm189, %v188, %v186
  %191 = vrot.lane.b32.xlu0 %v190, 64
  %v192 = vpop.permute.xlu0 %191
  %vm193 = vcmask 785920
  %s194 = scalar_lea.vmem %s1, 32
  %195 = vst.msk [vmem:[%s194] sm:$0xff] %vm193, %v192
  %s196 = scalar_lea.vmem %s0, 6
  %v197 = vld [vmem:[%s196] ss:$8 sm:$0xf]
  %s198 = scalar_lea.vmem %s0, 6
  %v199 = vld [vmem:[%s198] ss:$8 sm:$0xf0]
  %vm200 = vcmask 1047556
  %v201 = vsel %vm200, %v199, %v197
  %202 = vrot.lane.b32.xlu0 %v201, 64
  %v203 = vpop.permute.xlu0 %202
  %vm204 = vcmask 785920
  %s205 = scalar_lea.vmem %s1, 8
  %206 = vst.msk [vmem:[%s205] sm:$0xff] %vm204, %v203
  %s207 = scalar_lea.vmem %s0, 134
  %v208 = vld [vmem:[%s207] ss:$8 sm:$0xf]
  %s209 = scalar_lea.vmem %s0, 134
  %v210 = vld [vmem:[%s209] ss:$8 sm:$0xf0]
  %vm211 = vcmask 1047556
  %v212 = vsel %vm211, %v210, %v208
  %213 = vrot.lane.b32.xlu0 %v212, 64
  %v214 = vpop.permute.xlu0 %213
  %vm215 = vcmask 785920
  %s216 = scalar_lea.vmem %s1, 40
  %217 = vst.msk [vmem:[%s216] sm:$0xff] %vm215, %v214
  %s218 = scalar_lea.vmem %s0, 66
  %v219 = vld [vmem:[%s218] ss:$8 sm:$0xf]
  %s220 = scalar_lea.vmem %s0, 66
  %v221 = vld [vmem:[%s220] ss:$8 sm:$0xf0]
  %vm222 = vcmask 1047556
  %v223 = vsel %vm222, %v221, %v219
  %224 = vrot.lane.b32.xlu0 %v223, 64
  %v225 = vpop.permute.xlu0 %224
  %vm226 = vcmask 785920
  %s227 = scalar_lea.vmem %s1, 16
  %228 = vst.msk [vmem:[%s227] sm:$0xff] %vm226, %v225
  %s229 = scalar_lea.vmem %s0, 194
  %v230 = vld [vmem:[%s229] ss:$8 sm:$0xf]
  %s231 = scalar_lea.vmem %s0, 194
  %v232 = vld [vmem:[%s231] ss:$8 sm:$0xf0]
  %vm233 = vcmask 1047556
  %v234 = vsel %vm233, %v232, %v230
  %235 = vrot.lane.b32.xlu0 %v234, 64
  %v236 = vpop.permute.xlu0 %235
  %vm237 = vcmask 785920
  %s238 = scalar_lea.vmem %s1, 48
  %239 = vst.msk [vmem:[%s238] sm:$0xff] %vm237, %v236
  %s240 = scalar_lea.vmem %s0, 70
  %v241 = vld [vmem:[%s240] ss:$8 sm:$0xf]
  %s242 = scalar_lea.vmem %s0, 70
  %v243 = vld [vmem:[%s242] ss:$8 sm:$0xf0]
  %vm244 = vcmask 1047556
  %v245 = vsel %vm244, %v243, %v241
  %246 = vrot.lane.b32.xlu0 %v245, 64
  %v247 = vpop.permute.xlu0 %246
  %vm248 = vcmask 785920
  %s249 = scalar_lea.vmem %s1, 24
  %250 = vst.msk [vmem:[%s249] sm:$0xff] %vm248, %v247
  %s251 = scalar_lea.vmem %s0, 198
  %v252 = vld [vmem:[%s251] ss:$8 sm:$0xf]
  %s253 = scalar_lea.vmem %s0, 198
  %v254 = vld [vmem:[%s253] ss:$8 sm:$0xf0]
  %vm255 = vcmask 1047556
  %v256 = vsel %vm255, %v254, %v252
  %257 = vrot.lane.b32.xlu0 %v256, 64
  %v258 = vpop.permute.xlu0 %257
  %vm259 = vcmask 785920
  %s260 = scalar_lea.vmem %s1, 56
  %261 = vst.msk [vmem:[%s260] sm:$0xff] %vm259, %v258
  %s262 = scalar_lea.vmem %s0, 1
  %v263 = vld [vmem:[%s262] ss:$8 sm:$0xf]
  %s264 = scalar_lea.vmem %s0, 1
  %v265 = vld [vmem:[%s264] ss:$8 sm:$0xf0]
  %vm266 = vcmask 1047556
  %v267 = vsel %vm266, %v265, %v263
  %268 = vrot.lane.b32.xlu0 %v267, 32
  %v269 = vpop.permute.xlu0 %268
  %vm270 = vcmask 523520
  %271 = vst.msk [vmem:[%s1] sm:$0xff] %vm270, %v269
  %s272 = scalar_lea.vmem %s0, 129
  %v273 = vld [vmem:[%s272] ss:$8 sm:$0xf]
  %s274 = scalar_lea.vmem %s0, 129
  %v275 = vld [vmem:[%s274] ss:$8 sm:$0xf0]
  %vm276 = vcmask 1047556
  %v277 = vsel %vm276, %v275, %v273
  %278 = vrot.lane.b32.xlu0 %v277, 32
  %v279 = vpop.permute.xlu0 %278
  %vm280 = vcmask 523520
  %s281 = scalar_lea.vmem %s1, 32
  %282 = vst.msk [vmem:[%s281] sm:$0xff] %vm280, %v279
  %s283 = scalar_lea.vmem %s0, 5
  %v284 = vld [vmem:[%s283] ss:$8 sm:$0xf]
  %s285 = scalar_lea.vmem %s0, 5
  %v286 = vld [vmem:[%s285] ss:$8 sm:$0xf0]
  %vm287 = vcmask 1047556
  %v288 = vsel %vm287, %v286, %v284
  %289 = vrot.lane.b32.xlu0 %v288, 32
  %v290 = vpop.permute.xlu0 %289
  %vm291 = vcmask 523520
  %s292 = scalar_lea.vmem %s1, 8
  %293 = vst.msk [vmem:[%s292] sm:$0xff] %vm291, %v290
  %s294 = scalar_lea.vmem %s0, 133
  %v295 = vld [vmem:[%s294] ss:$8 sm:$0xf]
  %s296 = scalar_lea.vmem %s0, 133
  %v297 = vld [vmem:[%s296] ss:$8 sm:$0xf0]
  %vm298 = vcmask 1047556
  %v299 = vsel %vm298, %v297, %v295
  %300 = vrot.lane.b32.xlu0 %v299, 32
  %v301 = vpop.permute.xlu0 %300
  %vm302 = vcmask 523520
  %s303 = scalar_lea.vmem %s1, 40
  %304 = vst.msk [vmem:[%s303] sm:$0xff] %vm302, %v301
  %s305 = scalar_lea.vmem %s0, 65
  %v306 = vld [vmem:[%s305] ss:$8 sm:$0xf]
  %s307 = scalar_lea.vmem %s0, 65
  %v308 = vld [vmem:[%s307] ss:$8 sm:$0xf0]
  %vm309 = vcmask 1047556
  %v310 = vsel %vm309, %v308, %v306
  %311 = vrot.lane.b32.xlu0 %v310, 32
  %v312 = vpop.permute.xlu0 %311
  %vm313 = vcmask 523520
  %s314 = scalar_lea.vmem %s1, 16
  %315 = vst.msk [vmem:[%s314] sm:$0xff] %vm313, %v312
  %s316 = scalar_lea.vmem %s0, 193
  %v317 = vld [vmem:[%s316] ss:$8 sm:$0xf]
  %s318 = scalar_lea.vmem %s0, 193
  %v319 = vld [vmem:[%s318] ss:$8 sm:$0xf0]
  %vm320 = vcmask 1047556
  %v321 = vsel %vm320, %v319, %v317
  %322 = vrot.lane.b32.xlu0 %v321, 32
  %v323 = vpop.permute.xlu0 %322
  %vm324 = vcmask 523520
  %s325 = scalar_lea.vmem %s1, 48
  %326 = vst.msk [vmem:[%s325] sm:$0xff] %vm324, %v323
  %s327 = scalar_lea.vmem %s0, 69
  %v328 = vld [vmem:[%s327] ss:$8 sm:$0xf]
  %s329 = scalar_lea.vmem %s0, 69
  %v330 = vld [vmem:[%s329] ss:$8 sm:$0xf0]
  %vm331 = vcmask 1047556
  %v332 = vsel %vm331, %v330, %v328
  %333 = vrot.lane.b32.xlu0 %v332, 32
  %v334 = vpop.permute.xlu0 %333
  %vm335 = vcmask 523520
  %s336 = scalar_lea.vmem %s1, 24
  %337 = vst.msk [vmem:[%s336] sm:$0xff] %vm335, %v334
  %s338 = scalar_lea.vmem %s0, 197
  %v339 = vld [vmem:[%s338] ss:$8 sm:$0xf]
  %s340 = scalar_lea.vmem %s0, 197
  %v341 = vld [vmem:[%s340] ss:$8 sm:$0xf0]
  %vm342 = vcmask 1047556
  %v343 = vsel %vm342, %v341, %v339
  %344 = vrot.lane.b32.xlu0 %v343, 32
  %v345 = vpop.permute.xlu0 %344
  %vm346 = vcmask 523520
  %s347 = scalar_lea.vmem %s1, 56
  %348 = vst.msk [vmem:[%s347] sm:$0xff] %vm346, %v345

// kernel: dependency_forward.1
$region0: #{dependency_forward.1}
  #allocation0 [shape = 'u32[]', space=smem, size = 0x4, offset = 0x4, fixed_abs, tag = 'smem constant byte address 0x4 - core index']
  #allocation1 [shape = 'u32[144,128]{1,0:T(1,128)}', space=vmem, size = 0x12000, scoped, tag = 'internal scratch']
  %s0 = inlined_call_operand.vmem [shape: f32[2,8,32], index: 0, kind: input, shape index: {}]
  %s1 = inlined_call_operand.vmem [shape: f32[2,8,32], index: 1, kind: input, shape index: {}]
  %s2 = inlined_call_operand.vmem [shape: f32[32,128], index: 2, kind: input, shape index: {}]
  %s3 = inlined_call_operand.vmem [shape: f32[1,128], index: 3, kind: input, shape index: {}]
  %s4 = inlined_call_operand.vmem [shape: f32[32,32], index: 4, kind: input, shape index: {}]
  %s5 = inlined_call_operand.vmem [shape: f32[1,32], index: 5, kind: input, shape index: {}]
  %s6 = inlined_call_operand.vmem [shape: f32[32,256], index: 6, kind: input, shape index: {}]
  %s7 = inlined_call_operand.vmem [shape: f32[32,256], index: 7, kind: input, shape index: {}]
  %s8 = inlined_call_operand.vmem [shape: f32[256,8], index: 8, kind: input, shape index: {}]
  %s9 = inlined_call_operand.vmem [shape: f32[1,8], index: 9, kind: input, shape index: {}]
  %s10 = inlined_call_operand.vmem [shape: s32[2,8], index: 10, kind: input, shape index: {}]
  %s11 = inlined_call_operand.vmem [shape: s32[2,8], index: 11, kind: input, shape index: {}]
  %s12 = inlined_call_operand.vmem [shape: f32[2,8], index: 12, kind: input, shape index: {}]
  %s13 = inlined_call_operand.vmem [shape: f32[1,2], index: 13, kind: output, shape index: {}]
  %s14 = sld [smem:[#allocation0]]
  $region62: #{dependency_forward.1} parent=0
    _
  %s16 = ssub.s32 1, %s14
  %s17 = scalar_select 0, %s16, %s14
  $region1: #{dependency_forward.1} parent=0
    #allocation2 [shape = 'u8[512]{0}', space=smem, size = 0x200, scoped, tag = 'output window, operand 0, single buffered']
    #allocation3 [shape = 's32[1]{0}', space=sflag, size = 0x4, scoped, tag = 'scoped memory for dependency_forward.1']
    %18 = vsyncpa [#allocation3], 0
    // Predicated region
    $region2: #{dependency_forward.1} parent=1 // pred_check
      _
    $region3: #{dependency_forward.1} parent=1 // pred_check_branch
      %20 = sbr.rel (0) target = $region5
    $region4: #{dependency_forward.1} parent=1 // pred_region
      _
    $region5: #{dependency_forward.1} parent=1 // pred_fallthru
      _
    // Predicated region
    $region6: #{dependency_forward.1} parent=1 // pred_check
      _
    $region7: #{dependency_forward.1} parent=1 // pred_check_branch
      %22 = sbr.rel (0) target = $region9
    $region8: #{dependency_forward.1} parent=1 // pred_region
      _
    $region9: #{dependency_forward.1} parent=1 // pred_fallthru
      _
    // Predicated region
    $region10: #{dependency_forward.1} parent=1 // pred_check
      _
    $region11: #{dependency_forward.1} parent=1 // pred_check_branch
      %24 = sbr.rel (0) target = $region13
    $region12: #{dependency_forward.1} parent=1 // pred_region
      _
    $region13: #{dependency_forward.1} parent=1 // pred_fallthru
      _
    // Predicated region
    $region14: #{dependency_forward.1} parent=1 // pred_check
      _
    $region15: #{dependency_forward.1} parent=1 // pred_check_branch
      %26 = sbr.rel (0) target = $region17
    $region16: #{dependency_forward.1} parent=1 // pred_region
      _
    $region17: #{dependency_forward.1} parent=1 // pred_fallthru
      _
    // Predicated region
    $region18: #{dependency_forward.1} parent=1 // pred_check
      _
    $region19: #{dependency_forward.1} parent=1 // pred_check_branch
      %28 = sbr.rel (0) target = $region21
    $region20: #{dependency_forward.1} parent=1 // pred_region
      _
    $region21: #{dependency_forward.1} parent=1 // pred_fallthru
      _
    // Predicated region
    $region22: #{dependency_forward.1} parent=1 // pred_check
      _
    $region23: #{dependency_forward.1} parent=1 // pred_check_branch
      %30 = sbr.rel (0) target = $region25
    $region24: #{dependency_forward.1} parent=1 // pred_region
      _
    $region25: #{dependency_forward.1} parent=1 // pred_fallthru
      _
    // Predicated region
    $region26: #{dependency_forward.1} parent=1 // pred_check
      _
    $region27: #{dependency_forward.1} parent=1 // pred_check_branch
      %32 = sbr.rel (0) target = $region29
    $region28: #{dependency_forward.1} parent=1 // pred_region
      _
    $region29: #{dependency_forward.1} parent=1 // pred_fallthru
      _
    // Predicated region
    $region30: #{dependency_forward.1} parent=1 // pred_check
      _
    $region31: #{dependency_forward.1} parent=1 // pred_check_branch
      %34 = sbr.rel (0) target = $region33
    $region32: #{dependency_forward.1} parent=1 // pred_region
      _
    $region33: #{dependency_forward.1} parent=1 // pred_fallthru
      _
    // Predicated region
    $region34: #{dependency_forward.1} parent=1 // pred_check
      _
    $region35: #{dependency_forward.1} parent=1 // pred_check_branch
      %36 = sbr.rel (0) target = $region37
    $region36: #{dependency_forward.1} parent=1 // pred_region
      _
    $region37: #{dependency_forward.1} parent=1 // pred_fallthru
      _
    // Predicated region
    $region38: #{dependency_forward.1} parent=1 // pred_check
      _
    $region39: #{dependency_forward.1} parent=1 // pred_check_branch
      %38 = sbr.rel (0) target = $region41
    $region40: #{dependency_forward.1} parent=1 // pred_region
      _
    $region41: #{dependency_forward.1} parent=1 // pred_fallthru
      _
    // Predicated region
    $region42: #{dependency_forward.1} parent=1 // pred_check
      _
    $region43: #{dependency_forward.1} parent=1 // pred_check_branch
      %40 = sbr.rel (0) target = $region45
    $region44: #{dependency_forward.1} parent=1 // pred_region
      _
    $region45: #{dependency_forward.1} parent=1 // pred_fallthru
      _
    // Predicated region
    $region46: #{dependency_forward.1} parent=1 // pred_check
      _
    $region47: #{dependency_forward.1} parent=1 // pred_check_branch
      %42 = sbr.rel (0) target = $region49
    $region48: #{dependency_forward.1} parent=1 // pred_region
      _
    $region49: #{dependency_forward.1} parent=1 // pred_fallthru
      _
    // Predicated region
    $region50: #{dependency_forward.1} parent=1 // pred_check
      _
    $region51: #{dependency_forward.1} parent=1 // pred_check_branch
      %44 = sbr.rel (0) target = $region53
    $region52: #{dependency_forward.1} parent=1 // pred_region
      _
    $region53: #{dependency_forward.1} parent=1 // pred_fallthru
      _
    %v45 = vld [vmem:[%s0] sm:$0xff]
    %v46 = vld [vmem:[%s0 + $0x8] sm:$0xff]
    %v47 = vld [vmem:[%s1] sm:$0xff]
    %v48 = vld [vmem:[%s1 + $0x8] sm:$0xff]
    %v49 = vmul.f32 %v45, %v47
    %v50 = vmul.f32 %v46, %v48
    %v51 = vld [vmem:[%s2] sm:$0xff]
    %v52 = vld [vmem:[%s2 + $0x8] sm:$0xff]
    %v53 = vld [vmem:[%s2 + $0x10] sm:$0xff]
    %v54 = vld [vmem:[%s2 + $0x18] sm:$0xff]
    %v55 = vld [vmem:[%s3] sm:$0x1]
    %v57 = vlaneseq
    %v58 = vshrl.u32 %v57, 7
    %v59 = vsub.s32 0, %v58
    %v60 = vrot.slane %v55, %v59
    %vm62 = vcmask 261120
    %v64 = vsel %vm62, %v49, 0
    %v67 = vsel %vm62, %v50, 0
    %69 = vmatprep.subr.mxu0 0.0
    %70 = vmatpush1.msra.mxu0 %v51
    %71 = vmatprep.subr.mxu0 0.0
    %72 = vmatpush1.msra.mxu0 %v52
    %73 = vmatprep.subr.mxu0 0.0
    %74 = vmatpush1.msra.mxu0 %v53
    %75 = vmatprep.subr.mxu0 0.0
    %76 = vmatpush1.msra.mxu0 %v54
    %77 = vmatprep.subr.mxu0 0.0
    %78 = vmatpush1.msra.mxu0 0.0
    %79 = vmatprep.subr.mxu0 0.0
    %80 = vmatpush1.msra.mxu0 0.0
    %81 = vmatprep.subr.mxu0 0.0
    %82 = vmatpush1.msra.mxu0 0.0
    %83 = vmatprep.subr.mxu0 0.0
    %84 = vmatpush1.msra.mxu0 0.0
    %85 = vmatprep.subr.mxu0 0.0
    %86 = vmatpush1.msra.mxu0 0.0
    %87 = vmatprep.subr.mxu0 0.0
    %88 = vmatpush1.msra.mxu0 0.0
    %89 = vmatprep.subr.mxu0 0.0
    %90 = vmatpush1.msra.mxu0 0.0
    %91 = vmatprep.subr.mxu0 0.0
    %92 = vmatpush1.msra.mxu0 0.0
    %93 = vmatprep.subr.mxu0 0.0
    %94 = vmatpush1.msra.mxu0 0.0
    %95 = vmatprep.subr.mxu0 0.0
    %96 = vmatpush1.msra.mxu0 0.0
    %97 = vmatprep.subr.mxu0 0.0
    %98 = vmatpush1.msra.mxu0 0.0
    %99 = vmatprep.subr.mxu0 0.0
    %100 = vmatpush1.msra.mxu0 0.0
    %101 = vmatprep.subr.mxu0 0.0
    %102 = vmatpush1.msra.mxu0 0.0
    %103 = vmatprep.subr.mxu0 0.0
    %104 = vmatpush1.msra.mxu0 0.0
    %105 = vmatprep.subr.mxu0 0.0
    %106 = vmatpush1.msra.mxu0 0.0
    %107 = vmatprep.subr.mxu0 0.0
    %108 = vmatpush1.msra.mxu0 0.0
    %109 = vmatprep.subr.mxu0 0.0
    %110 = vmatpush1.msra.mxu0 0.0
    %111 = vmatprep.subr.mxu0 0.0
    %112 = vmatpush1.msra.mxu0 0.0
    %113 = vmatprep.subr.mxu0 0.0
    %114 = vmatpush1.msra.mxu0 0.0
    %115 = vmatprep.subr.mxu0 0.0
    %116 = vmatpush1.msra.mxu0 0.0
    %117 = vmatprep.subr.mxu0 0.0
    %118 = vmatpush1.msra.mxu0 0.0
    %119 = vmatprep.subr.mxu0 0.0
    %120 = vmatpush1.msra.mxu0 0.0
    %121 = vmatprep.subr.mxu0 0.0
    %122 = vmatpush1.msra.mxu0 0.0
    %123 = vmatprep.subr.mxu0 0.0
    %124 = vmatpush1.msra.mxu0 0.0
    %125 = vmatprep.subr.mxu0 0.0
    %126 = vmatpush1.msra.mxu0 0.0
    %127 = vmatprep.subr.mxu0 0.0
    %128 = vmatpush1.msra.mxu0 0.0
    %129 = vmatprep.subr.mxu0 0.0
    %130 = vmatpush1.msra.mxu0 0.0
    %131 = vmatprep.subr.mxu0 0.0
    %132 = vmatpush1.msra.mxu0 0.0
    %133 = vmatprep.mubr.f32.mxu0 0.0
    %134 = vmatmul.mubr.f32.gmra.mrb[0].mxu0 %v64
    %v135 = vpop.f32.mrb[0].mxu0
    %v136 = vadd.f32 %v60, %v135
    %v137 = vpop.f32.mrb[0].mxu0
    %138 = vmatprep.mubr.f32.mxu0 0.0
    %139 = vmatmul.mubr.f32.gmra.mrb[0].mxu0 %v67
    %v140 = vpop.f32.mrb[0].mxu0
    %v141 = vadd.f32 %v60, %v140
    %v142 = vpop.f32.mrb[0].mxu0
    %143 = vdwg.mxu0
    %v144 = vmax.f32 %v136, 0.0
    %v145 = vmax.f32 %v141, 0.0
    %v146 = vld [vmem:[%s4] sm:$0xff]
    %v147 = vld [vmem:[%s4 + $0x8] sm:$0xff]
    %v148 = vld [vmem:[%s4 + $0x10] sm:$0xff]
    %v149 = vld [vmem:[%s4 + $0x18] sm:$0xff]
    %v150 = vld [vmem:[%s5] sm:$0x1]
    %v152 = vlaneseq
    %v153 = vshrl.u32 %v152, 7
    %v154 = vsub.s32 0, %v153
    %v155 = vrot.slane %v150, %v154
    %v158 = vsel %vm62, %v144, 0
    %v161 = vsel %vm62, %v145, 0
    %163 = vmatprep.subr.mxu0 0.0
    %164 = vmatpush1.msra.mxu0 %v146
    %165 = vmatprep.subr.mxu0 0.0
    %166 = vmatpush1.msra.mxu0 %v147
    %167 = vmatprep.subr.mxu0 0.0
    %168 = vmatpush1.msra.mxu0 %v148
    %169 = vmatprep.subr.mxu0 0.0
    %170 = vmatpush1.msra.mxu0 %v149
    %171 = vmatprep.subr.mxu0 0.0
    %172 = vmatpush1.msra.mxu0 0.0
    %173 = vmatprep.subr.mxu0 0.0
    %174 = vmatpush1.msra.mxu0 0.0
    %175 = vmatprep.subr.mxu0 0.0
    %176 = vmatpush1.msra.mxu0 0.0
    %177 = vmatprep.subr.mxu0 0.0
    %178 = vmatpush1.msra.mxu0 0.0
    %179 = vmatprep.subr.mxu0 0.0
    %180 = vmatpush1.msra.mxu0 0.0
    %181 = vmatprep.subr.mxu0 0.0
    %182 = vmatpush1.msra.mxu0 0.0
    %183 = vmatprep.subr.mxu0 0.0
    %184 = vmatpush1.msra.mxu0 0.0
    %185 = vmatprep.subr.mxu0 0.0
    %186 = vmatpush1.msra.mxu0 0.0
    %187 = vmatprep.subr.mxu0 0.0
    %188 = vmatpush1.msra.mxu0 0.0
    %189 = vmatprep.subr.mxu0 0.0
    %190 = vmatpush1.msra.mxu0 0.0
    %191 = vmatprep.subr.mxu0 0.0
    %192 = vmatpush1.msra.mxu0 0.0
    %193 = vmatprep.subr.mxu0 0.0
    %194 = vmatpush1.msra.mxu0 0.0
    %195 = vmatprep.subr.mxu0 0.0
    %196 = vmatpush1.msra.mxu0 0.0
    %197 = vmatprep.subr.mxu0 0.0
    %198 = vmatpush1.msra.mxu0 0.0
    %199 = vmatprep.subr.mxu0 0.0
    %200 = vmatpush1.msra.mxu0 0.0
    %201 = vmatprep.subr.mxu0 0.0
    %202 = vmatpush1.msra.mxu0 0.0
    %203 = vmatprep.subr.mxu0 0.0
    %204 = vmatpush1.msra.mxu0 0.0
    %205 = vmatprep.subr.mxu0 0.0
    %206 = vmatpush1.msra.mxu0 0.0
    %207 = vmatprep.subr.mxu0 0.0
    %208 = vmatpush1.msra.mxu0 0.0
    %209 = vmatprep.subr.mxu0 0.0
    %210 = vmatpush1.msra.mxu0 0.0
    %211 = vmatprep.subr.mxu0 0.0
    %212 = vmatpush1.msra.mxu0 0.0
    %213 = vmatprep.subr.mxu0 0.0
    %214 = vmatpush1.msra.mxu0 0.0
    %215 = vmatprep.subr.mxu0 0.0
    %216 = vmatpush1.msra.mxu0 0.0
    %217 = vmatprep.subr.mxu0 0.0
    %218 = vmatpush1.msra.mxu0 0.0
    %219 = vmatprep.subr.mxu0 0.0
    %220 = vmatpush1.msra.mxu0 0.0
    %221 = vmatprep.subr.mxu0 0.0
    %222 = vmatpush1.msra.mxu0 0.0
    %223 = vmatprep.subr.mxu0 0.0
    %224 = vmatpush1.msra.mxu0 0.0
    %225 = vmatprep.subr.mxu0 0.0
    %226 = vmatpush1.msra.mxu0 0.0
    %227 = vmatprep.mubr.f32.mxu0 0.0
    %228 = vmatmul.mubr.f32.gmra.mrb[0].mxu0 %v158
    %v229 = vpop.f32.mrb[0].mxu0
    %v230 = vadd.f32 %v155, %v229
    %v231 = vpop.f32.mrb[0].mxu0
    %232 = vmatprep.mubr.f32.mxu0 0.0
    %233 = vmatmul.mubr.f32.gmra.mrb[0].mxu0 %v161
    %v234 = vpop.f32.mrb[0].mxu0
    %v235 = vadd.f32 %v155, %v234
    %v236 = vpop.f32.mrb[0].mxu0
    %237 = vdwg.mxu0
    %238 = vrot.lane.b32.xlu0 %v144, 96
    %v239 = vpop.permute.xlu0 %238
    %v241 = vsel %vm62, %v230, 0
    %v243 = vsel %vm62, %v239, 0
    %245 = vmatprep.subr.mxu0 0.0
    %246 = vmatpush1.xpose.msra.mxu0 %v243
    %247 = vmatprep.subr.mxu0 0.0
    %248 = vmatpush1.xpose.msra.mxu0 0.0
    %249 = vmatprep.subr.mxu0 0.0
    %250 = vmatpush1.xpose.msra.mxu0 0.0
    %251 = vmatprep.subr.mxu0 0.0
    %252 = vmatpush1.xpose.msra.mxu0 0.0
    %253 = vmatprep.subr.mxu0 0.0
    %254 = vmatpush1.xpose.msra.mxu0 0.0
    %255 = vmatprep.subr.mxu0 0.0
    %256 = vmatpush1.xpose.msra.mxu0 0.0
    %257 = vmatprep.subr.mxu0 0.0
    %258 = vmatpush1.xpose.msra.mxu0 0.0
    %259 = vmatprep.subr.mxu0 0.0
    %260 = vmatpush1.xpose.msra.mxu0 0.0
    %261 = vmatprep.subr.mxu0 0.0
    %262 = vmatpush1.xpose.msra.mxu0 0.0
    %263 = vmatprep.subr.mxu0 0.0
    %264 = vmatpush1.xpose.msra.mxu0 0.0
    %265 = vmatprep.subr.mxu0 0.0
    %266 = vmatpush1.xpose.msra.mxu0 0.0
    %267 = vmatprep.subr.mxu0 0.0
    %268 = vmatpush1.xpose.msra.mxu0 0.0
    %269 = vmatprep.subr.mxu0 0.0
    %270 = vmatpush1.xpose.msra.mxu0 0.0
    %271 = vmatprep.subr.mxu0 0.0
    %272 = vmatpush1.xpose.msra.mxu0 0.0
    %273 = vmatprep.subr.mxu0 0.0
    %274 = vmatpush1.xpose.msra.mxu0 0.0
    %275 = vmatprep.subr.mxu0 0.0
    %276 = vmatpush1.xpose.msra.mxu0 0.0
    %277 = vmatprep.subr.mxu0 0.0
    %278 = vmatpush1.xpose.msra.mxu0 0.0
    %279 = vmatprep.subr.mxu0 0.0
    %280 = vmatpush1.xpose.msra.mxu0 0.0
    %281 = vmatprep.subr.mxu0 0.0
    %282 = vmatpush1.xpose.msra.mxu0 0.0
    %283 = vmatprep.subr.mxu0 0.0
    %284 = vmatpush1.xpose.msra.mxu0 0.0
    %285 = vmatprep.subr.mxu0 0.0
    %286 = vmatpush1.xpose.msra.mxu0 0.0
    %287 = vmatprep.subr.mxu0 0.0
    %288 = vmatpush1.xpose.msra.mxu0 0.0
    %289 = vmatprep.subr.mxu0 0.0
    %290 = vmatpush1.xpose.msra.mxu0 0.0
    %291 = vmatprep.subr.mxu0 0.0
    %292 = vmatpush1.xpose.msra.mxu0 0.0
    %293 = vmatprep.subr.mxu0 0.0
    %294 = vmatpush1.xpose.msra.mxu0 0.0
    %295 = vmatprep.subr.mxu0 0.0
    %296 = vmatpush1.xpose.msra.mxu0 0.0
    %297 = vmatprep.subr.mxu0 0.0
    %298 = vmatpush1.xpose.msra.mxu0 0.0
    %299 = vmatprep.subr.mxu0 0.0
    %300 = vmatpush1.xpose.msra.mxu0 0.0
    %301 = vmatprep.subr.mxu0 0.0
    %302 = vmatpush1.xpose.msra.mxu0 0.0
    %303 = vmatprep.subr.mxu0 0.0
    %304 = vmatpush1.xpose.msra.mxu0 0.0
    %305 = vmatprep.subr.mxu0 0.0
    %306 = vmatpush1.xpose.msra.mxu0 0.0
    %307 = vmatprep.subr.mxu0 0.0
    %308 = vmatpush1.xpose.msra.mxu0 0.0
    %309 = vmatprep.mubr.f32.mxu0 0.0
    %310 = vmatmul.mubr.f32.gmra.mrb[0].mxu0 %v241
    %v311 = vpop.f32.mrb[0].mxu0
    %v312 = vadd.f32 0.0, %v311
    %v313 = vpop.f32.mrb[0].mxu0
    %314 = vdwg.mxu0
    %315 = vrot.lane.b32.xlu0 %v145, 96
    %v316 = vpop.permute.xlu0 %315
    %v318 = vsel %vm62, %v235, 0
    %v320 = vsel %vm62, %v316, 0
    %322 = vmatprep.subr.mxu0 0.0
    %323 = vmatpush1.xpose.msra.mxu0 %v320
    %324 = vmatprep.subr.mxu0 0.0
    %325 = vmatpush1.xpose.msra.mxu0 0.0
    %326 = vmatprep.subr.mxu0 0.0
    %327 = vmatpush1.xpose.msra.mxu0 0.0
    %328 = vmatprep.subr.mxu0 0.0
    %329 = vmatpush1.xpose.msra.mxu0 0.0
    %330 = vmatprep.subr.mxu0 0.0
    %331 = vmatpush1.xpose.msra.mxu0 0.0
    %332 = vmatprep.subr.mxu0 0.0
    %333 = vmatpush1.xpose.msra.mxu0 0.0
    %334 = vmatprep.subr.mxu0 0.0
    %335 = vmatpush1.xpose.msra.mxu0 0.0
    %336 = vmatprep.subr.mxu0 0.0
    %337 = vmatpush1.xpose.msra.mxu0 0.0
    %338 = vmatprep.subr.mxu0 0.0
    %339 = vmatpush1.xpose.msra.mxu0 0.0
    %340 = vmatprep.subr.mxu0 0.0
    %341 = vmatpush1.xpose.msra.mxu0 0.0
    %342 = vmatprep.subr.mxu0 0.0
    %343 = vmatpush1.xpose.msra.mxu0 0.0
    %344 = vmatprep.subr.mxu0 0.0
    %345 = vmatpush1.xpose.msra.mxu0 0.0
    %346 = vmatprep.subr.mxu0 0.0
    %347 = vmatpush1.xpose.msra.mxu0 0.0
    %348 = vmatprep.subr.mxu0 0.0
    %349 = vmatpush1.xpose.msra.mxu0 0.0
    %350 = vmatprep.subr.mxu0 0.0
    %351 = vmatpush1.xpose.msra.mxu0 0.0
    %352 = vmatprep.subr.mxu0 0.0
    %353 = vmatpush1.xpose.msra.mxu0 0.0
    %354 = vmatprep.subr.mxu0 0.0
    %355 = vmatpush1.xpose.msra.mxu0 0.0
    %356 = vmatprep.subr.mxu0 0.0
    %357 = vmatpush1.xpose.msra.mxu0 0.0
    %358 = vmatprep.subr.mxu0 0.0
    %359 = vmatpush1.xpose.msra.mxu0 0.0
    %360 = vmatprep.subr.mxu0 0.0
    %361 = vmatpush1.xpose.msra.mxu0 0.0
    %362 = vmatprep.subr.mxu0 0.0
    %363 = vmatpush1.xpose.msra.mxu0 0.0
    %364 = vmatprep.subr.mxu0 0.0
    %365 = vmatpush1.xpose.msra.mxu0 0.0
    %366 = vmatprep.subr.mxu0 0.0
    %367 = vmatpush1.xpose.msra.mxu0 0.0
    %368 = vmatprep.subr.mxu0 0.0
    %369 = vmatpush1.xpose.msra.mxu0 0.0
    %370 = vmatprep.subr.mxu0 0.0
    %371 = vmatpush1.xpose.msra.mxu0 0.0
    %372 = vmatprep.subr.mxu0 0.0
    %373 = vmatpush1.xpose.msra.mxu0 0.0
    %374 = vmatprep.subr.mxu0 0.0
    %375 = vmatpush1.xpose.msra.mxu0 0.0
    %376 = vmatprep.subr.mxu0 0.0
    %377 = vmatpush1.xpose.msra.mxu0 0.0
    %378 = vmatprep.subr.mxu0 0.0
    %379 = vmatpush1.xpose.msra.mxu0 0.0
    %380 = vmatprep.subr.mxu0 0.0
    %381 = vmatpush1.xpose.msra.mxu0 0.0
    %382 = vmatprep.subr.mxu0 0.0
    %383 = vmatpush1.xpose.msra.mxu0 0.0
    %384 = vmatprep.subr.mxu0 0.0
    %385 = vmatpush1.xpose.msra.mxu0 0.0
    %386 = vmatprep.mubr.f32.mxu0 0.0
    %387 = vmatmul.mubr.f32.gmra.mrb[0].mxu0 %v318
    %v388 = vpop.f32.mrb[0].mxu0
    %v389 = vadd.f32 0.0, %v388
    %v390 = vpop.f32.mrb[0].mxu0
    %391 = vdwg.mxu0
    %vm392 = vcmask 64512
    %v393 = vsel %vm392, %v312, -inf
    %394 = vmax.xlane.f32.xlu0 %v393
    %v395 = vpop.xlane.xlu0 %394
    %v396 = vsel %vm392, %v389, -inf
    %397 = vmax.xlane.f32.xlu0 %v396
    %v398 = vpop.xlane.xlu0 %397
    %v399 = vsub.f32 %v312, %v395
    %v400 = vsub.f32 %v389, %v398
    %v401 = vmul.f32 %v399, 1.442695
    %v402 = vpow.pop %v401
    %v403 = vmul.f32 %v400, 1.442695
    %v404 = vpow.pop %v403
    %v405 = vsel %vm392, %v402, 0.0
    %406 = vadd.xlane.f32.xlu0 %v405
    %v407 = vpop.xlane.xlu0 %406
    %v408 = vsel %vm392, %v404, 0.0
    %409 = vadd.xlane.f32.xlu0 %v408
    %v410 = vpop.xlane.xlu0 %409
    %v411 = vlog2.pop %v407
    %v412 = vmul.f32 %v411, 0.6931472
    %v413 = vlog2.pop %v410
    %v414 = vmul.f32 %v413, 0.6931472
    %v415 = vsub.f32 %v399, %v412
    %v416 = vsub.f32 %v400, %v414
    %v417 = vlaneseq
    %v418 = vand.u32 %v417, 127
    %v419 = vld [vmem:[%s10] sm:$0x3]
    %v420 = vlaneseq
    %v421 = vshrl.u32 %v420, 7
    %v422 = vsub.s32 0, %v421
    %v423 = vrot.slane %v419, %v422
    %425 = vbcast.lane.b32.xlu0 %v423, 256
    %v426 = vpop.permute.xlu0 %425
    %v427 = vlaneseq
    %v428 = vshrl.u32 %v427, 7
    %v429 = vsub.s32 1, %v428
    %v430 = vrot.slane %v419, %v429
    %432 = vbcast.lane.b32.xlu0 %v430, 256
    %v433 = vpop.permute.xlu0 %432
    %vm434 = vcmp.eq.s32.totalorder %v418, %v426
    %vm435 = vcmp.eq.s32.totalorder %v418, %v433
    %v436 = vsel %vm434, 1, 0
    %v437 = vsel %vm435, 1, 0
    %v438 = vcvt.s32.f32 %v436
    %v439 = vcvt.s32.f32 %v437
    %v440 = vld [vmem:[%s12] sm:$0x3]
    %v441 = vmul.f32 %v415, %v438
    %v442 = vmul.f32 %v416, %v439
    %v443 = vsel %vm392, %v441, 0.0
    %444 = vadd.xlane.f32.xlu0 %v443
    %v445 = vpop.xlane.xlu0 %444
    %v446 = vsel %vm392, %v442, 0.0
    %447 = vadd.xlane.f32.xlu0 %v446
    %v448 = vpop.xlane.xlu0 %447
    %v450 = vlaneseq
    %v451 = vshrl.u32 %v450, 7
    %v452 = vsub.s32 0, %v451
    %v453 = vrot.slane %v440, %v452
    %455 = vbcast.lane.b32.xlu0 %v453, 256
    %v456 = vpop.permute.xlu0 %455
    %v457 = vlaneseq
    %v458 = vshrl.u32 %v457, 7
    %v459 = vsub.s32 1, %v458
    %v460 = vrot.slane %v440, %v459
    %462 = vbcast.lane.b32.xlu0 %v460, 256
    %v463 = vpop.permute.xlu0 %462
    %v466 = vmul.f32 %v445, %v456
    %v467 = vmul.f32 %v448, %v463
    %470 = vset.pattern.permute.xlu0 0
    %471 = vperm.xlu0 %470, %v466
    %v472 = vpop.permute.xlu0 %471
    %473 = vset.pattern.permute.xlu0 0
    %474 = vperm.xlu0 %473, %v467
    %v475 = vpop.permute.xlu0 %474
    %v476 = vlaneseq
    %v477 = vshrl.u32 %v476, 7
    %v478 = vsub.s32 %v418, %v477
    %v479 = vrot.slane %v472, %v478
    %v480 = vlaneseq
    %v481 = vshrl.u32 %v480, 7
    %v482 = vsub.s32 %v418, %v481
    %v483 = vrot.slane %v475, %v482
    %vm484 = vcmask 1041409
    %v485 = vsel %vm484, %v483, %v479
    %vm487 = vcmask 58368
    %v488 = vsel %vm487, %v485, 0.0
    %489 = vadd.xlane.f32.xlu0 %v488
    %v490 = vpop.xlane.xlu0 %489
    %v491 = vrot.slane %v490, 4
    %v492 = vadd.f32 %v490, %v491
    %v493 = vrot.slane %v492, 2
    %v494 = vadd.f32 %v492, %v493
    %v495 = vrot.slane %v494, 1
    %v496 = vadd.f32 %v494, %v495
    %s497 = vtos %v496
    %s498 = ssub.f32 0.0, %s497
    %499 = vrot.lane.b32.xlu0 %v144, 32
    %v500 = vpop.permute.xlu0 %499
    %v503 = vsel %vm392, %v438, 0
    %505 = vmatprep.subr.mxu0 0.0
    %506 = vmatpush1.msra.mxu0 %v500
    %507 = vmatprep.subr.mxu0 0.0
    %508 = vmatpush1.msra.mxu0 0.0
    %509 = vmatprep.subr.mxu0 0.0
    %510 = vmatpush1.msra.mxu0 0.0
    %511 = vmatprep.subr.mxu0 0.0
    %512 = vmatpush1.msra.mxu0 0.0
    %513 = vmatprep.subr.mxu0 0.0
    %514 = vmatpush1.msra.mxu0 0.0
    %515 = vmatprep.subr.mxu0 0.0
    %516 = vmatpush1.msra.mxu0 0.0
    %517 = vmatprep.subr.mxu0 0.0
    %518 = vmatpush1.msra.mxu0 0.0
    %519 = vmatprep.subr.mxu0 0.0
    %520 = vmatpush1.msra.mxu0 0.0
    %521 = vmatprep.subr.mxu0 0.0
    %522 = vmatpush1.msra.mxu0 0.0
    %523 = vmatprep.subr.mxu0 0.0
    %524 = vmatpush1.msra.mxu0 0.0
    %525 = vmatprep.subr.mxu0 0.0
    %526 = vmatpush1.msra.mxu0 0.0
    %527 = vmatprep.subr.mxu0 0.0
    %528 = vmatpush1.msra.mxu0 0.0
    %529 = vmatprep.subr.mxu0 0.0
    %530 = vmatpush1.msra.mxu0 0.0
    %531 = vmatprep.subr.mxu0 0.0
    %532 = vmatpush1.msra.mxu0 0.0
    %533 = vmatprep.subr.mxu0 0.0
    %534 = vmatpush1.msra.mxu0 0.0
    %535 = vmatprep.subr.mxu0 0.0
    %536 = vmatpush1.msra.mxu0 0.0
    %537 = vmatprep.subr.mxu0 0.0
    %538 = vmatpush1.msra.mxu0 0.0
    %539 = vmatprep.subr.mxu0 0.0
    %540 = vmatpush1.msra.mxu0 0.0
    %541 = vmatprep.subr.mxu0 0.0
    %542 = vmatpush1.msra.mxu0 0.0
    %543 = vmatprep.subr.mxu0 0.0
    %544 = vmatpush1.msra.mxu0 0.0
    %545 = vmatprep.subr.mxu0 0.0
    %546 = vmatpush1.msra.mxu0 0.0
    %547 = vmatprep.subr.mxu0 0.0
    %548 = vmatpush1.msra.mxu0 0.0
    %549 = vmatprep.subr.mxu0 0.0
    %550 = vmatpush1.msra.mxu0 0.0
    %551 = vmatprep.subr.mxu0 0.0
    %552 = vmatpush1.msra.mxu0 0.0
    %553 = vmatprep.subr.mxu0 0.0
    %554 = vmatpush1.msra.mxu0 0.0
    %555 = vmatprep.subr.mxu0 0.0
    %556 = vmatpush1.msra.mxu0 0.0
    %557 = vmatprep.subr.mxu0 0.0
    %558 = vmatpush1.msra.mxu0 0.0
    %559 = vmatprep.subr.mxu0 0.0
    %560 = vmatpush1.msra.mxu0 0.0
    %561 = vmatprep.subr.mxu0 0.0
    %562 = vmatpush1.msra.mxu0 0.0
    %563 = vmatprep.subr.mxu0 0.0
    %564 = vmatpush1.msra.mxu0 0.0
    %565 = vmatprep.subr.mxu0 0.0
    %566 = vmatpush1.msra.mxu0 0.0
    %567 = vmatprep.subr.mxu0 0.0
    %568 = vmatpush1.msra.mxu0 0.0
    %569 = vmatprep.mubr.f32.mxu0 0.0
    %570 = vmatmul.mubr.f32.gmra.mrb[0].mxu0 %v503
    %v571 = vpop.f32.mrb[0].mxu0
    %v572 = vadd.f32 0.0, %v571
    %v573 = vpop.f32.mrb[0].mxu0
    %574 = vdwg.mxu0
    %575 = vrot.lane.b32.xlu0 %v145, 32
    %v576 = vpop.permute.xlu0 %575
    %v579 = vsel %vm392, %v439, 0
    %581 = vmatprep.subr.mxu0 0.0
    %582 = vmatpush1.msra.mxu0 %v576
    %583 = vmatprep.subr.mxu0 0.0
    %584 = vmatpush1.msra.mxu0 0.0
    %585 = vmatprep.subr.mxu0 0.0
    %586 = vmatpush1.msra.mxu0 0.0
    %587 = vmatprep.subr.mxu0 0.0
    %588 = vmatpush1.msra.mxu0 0.0
    %589 = vmatprep.subr.mxu0 0.0
    %590 = vmatpush1.msra.mxu0 0.0
    %591 = vmatprep.subr.mxu0 0.0
    %592 = vmatpush1.msra.mxu0 0.0
    %593 = vmatprep.subr.mxu0 0.0
    %594 = vmatpush1.msra.mxu0 0.0
    %595 = vmatprep.subr.mxu0 0.0
    %596 = vmatpush1.msra.mxu0 0.0
    %597 = vmatprep.subr.mxu0 0.0
    %598 = vmatpush1.msra.mxu0 0.0
    %599 = vmatprep.subr.mxu0 0.0
    %600 = vmatpush1.msra.mxu0 0.0
    %601 = vmatprep.subr.mxu0 0.0
    %602 = vmatpush1.msra.mxu0 0.0
    %603 = vmatprep.subr.mxu0 0.0
    %604 = vmatpush1.msra.mxu0 0.0
    %605 = vmatprep.subr.mxu0 0.0
    %606 = vmatpush1.msra.mxu0 0.0
    %607 = vmatprep.subr.mxu0 0.0
    %608 = vmatpush1.msra.mxu0 0.0
    %609 = vmatprep.subr.mxu0 0.0
    %610 = vmatpush1.msra.mxu0 0.0
    %611 = vmatprep.subr.mxu0 0.0
    %612 = vmatpush1.msra.mxu0 0.0
    %613 = vmatprep.subr.mxu0 0.0
    %614 = vmatpush1.msra.mxu0 0.0
    %615 = vmatprep.subr.mxu0 0.0
    %616 = vmatpush1.msra.mxu0 0.0
    %617 = vmatprep.subr.mxu0 0.0
    %618 = vmatpush1.msra.mxu0 0.0
    %619 = vmatprep.subr.mxu0 0.0
    %620 = vmatpush1.msra.mxu0 0.0
    %621 = vmatprep.subr.mxu0 0.0
    %622 = vmatpush1.msra.mxu0 0.0
    %623 = vmatprep.subr.mxu0 0.0
    %624 = vmatpush1.msra.mxu0 0.0
    %625 = vmatprep.subr.mxu0 0.0
    %626 = vmatpush1.msra.mxu0 0.0
    %627 = vmatprep.subr.mxu0 0.0
    %628 = vmatpush1.msra.mxu0 0.0
    %629 = vmatprep.subr.mxu0 0.0
    %630 = vmatpush1.msra.mxu0 0.0
    %631 = vmatprep.subr.mxu0 0.0
    %632 = vmatpush1.msra.mxu0 0.0
    %633 = vmatprep.subr.mxu0 0.0
    %634 = vmatpush1.msra.mxu0 0.0
    %635 = vmatprep.subr.mxu0 0.0
    %636 = vmatpush1.msra.mxu0 0.0
    %637 = vmatprep.subr.mxu0 0.0
    %638 = vmatpush1.msra.mxu0 0.0
    %639 = vmatprep.subr.mxu0 0.0
    %640 = vmatpush1.msra.mxu0 0.0
    %641 = vmatprep.subr.mxu0 0.0
    %642 = vmatpush1.msra.mxu0 0.0
    %643 = vmatprep.subr.mxu0 0.0
    %644 = vmatpush1.msra.mxu0 0.0
    %645 = vmatprep.mubr.f32.mxu0 0.0
    %646 = vmatmul.mubr.f32.gmra.mrb[0].mxu0 %v579
    %v647 = vpop.f32.mrb[0].mxu0
    %v648 = vadd.f32 0.0, %v647
    %v649 = vpop.f32.mrb[0].mxu0
    %650 = vdwg.mxu0
    %v651 = vld [vmem:[%s6] sm:$0xff]
    %v652 = vld [vmem:[%s6 + $0x8] sm:$0xff]
    %v653 = vld [vmem:[%s6 + $0x10] sm:$0xff]
    %v654 = vld [vmem:[%s6 + $0x18] sm:$0xff]
    %v655 = vld [vmem:[%s6 + $0x20] sm:$0xff]
    %v656 = vld [vmem:[%s6 + $0x28] sm:$0xff]
    %v657 = vld [vmem:[%s6 + $0x30] sm:$0xff]
    %v658 = vld [vmem:[%s6 + $0x38] sm:$0xff]
    %659 = vrot.lane.b32.xlu0 %v144, 64
    %v660 = vpop.permute.xlu0 %659
    %661 = vrot.lane.b32.xlu0 %v145, 64
    %v662 = vpop.permute.xlu0 %661
    %v663 = vsel %vm62, %v660, 0
    %v665 = vsel %vm62, %v662, 0
    %667 = vmatprep.subr.mxu0 %v652
    %668 = vmatpush1.msra.mxu0 %v651
    %669 = vmatprep.subr.mxu0 %v654
    %670 = vmatpush1.msra.mxu0 %v653
    %671 = vmatprep.subr.mxu0 %v656
    %672 = vmatpush1.msra.mxu0 %v655
    %673 = vmatprep.subr.mxu0 %v658
    %674 = vmatpush1.msra.mxu0 %v657
    %675 = vmatprep.subr.mxu0 0.0
    %676 = vmatpush1.msra.mxu0 0.0
    %677 = vmatprep.subr.mxu0 0.0
    %678 = vmatpush1.msra.mxu0 0.0
    %679 = vmatprep.subr.mxu0 0.0
    %680 = vmatpush1.msra.mxu0 0.0
    %681 = vmatprep.subr.mxu0 0.0
    %682 = vmatpush1.msra.mxu0 0.0
    %683 = vmatprep.subr.mxu0 0.0
    %684 = vmatpush1.msra.mxu0 0.0
    %685 = vmatprep.subr.mxu0 0.0
    %686 = vmatpush1.msra.mxu0 0.0
    %687 = vmatprep.subr.mxu0 0.0
    %688 = vmatpush1.msra.mxu0 0.0
    %689 = vmatprep.subr.mxu0 0.0
    %690 = vmatpush1.msra.mxu0 0.0
    %691 = vmatprep.subr.mxu0 0.0
    %692 = vmatpush1.msra.mxu0 0.0
    %693 = vmatprep.subr.mxu0 0.0
    %694 = vmatpush1.msra.mxu0 0.0
    %695 = vmatprep.subr.mxu0 0.0
    %696 = vmatpush1.msra.mxu0 0.0
    %697 = vmatprep.subr.mxu0 0.0
    %698 = vmatpush1.msra.mxu0 0.0
    %699 = vmatprep.subr.mxu0 0.0
    %700 = vmatpush1.msra.mxu0 0.0
    %701 = vmatprep.subr.mxu0 0.0
    %702 = vmatpush1.msra.mxu0 0.0
    %703 = vmatprep.subr.mxu0 0.0
    %704 = vmatpush1.msra.mxu0 0.0
    %705 = vmatprep.subr.mxu0 0.0
    %706 = vmatpush1.msra.mxu0 0.0
    %707 = vmatprep.subr.mxu0 0.0
    %708 = vmatpush1.msra.mxu0 0.0
    %709 = vmatprep.subr.mxu0 0.0
    %710 = vmatpush1.msra.mxu0 0.0
    %711 = vmatprep.subr.mxu0 0.0
    %712 = vmatpush1.msra.mxu0 0.0
    %713 = vmatprep.subr.mxu0 0.0
    %714 = vmatpush1.msra.mxu0 0.0
    %715 = vmatprep.subr.mxu0 0.0
    %716 = vmatpush1.msra.mxu0 0.0
    %717 = vmatprep.subr.mxu0 0.0
    %718 = vmatpush1.msra.mxu0 0.0
    %719 = vmatprep.subr.mxu0 0.0
    %720 = vmatpush1.msra.mxu0 0.0
    %721 = vmatprep.subr.mxu0 0.0
    %722 = vmatpush1.msra.mxu0 0.0
    %723 = vmatprep.subr.mxu0 0.0
    %724 = vmatpush1.msra.mxu0 0.0
    %725 = vmatprep.subr.mxu0 0.0
    %726 = vmatpush1.msra.mxu0 0.0
    %727 = vmatprep.subr.mxu0 0.0
    %728 = vmatpush1.msra.mxu0 0.0
    %729 = vmatprep.subr.mxu0 0.0
    %730 = vmatpush1.msra.mxu0 0.0
    %731 = vmatprep.mubr.f32.mxu0 0.0
    %732 = vmatmul.mubr.f32.gmra.mrb[0].mxu0 %v663
    %v733 = vpop.f32.mrb[0].mxu0
    %v734 = vadd.f32 0.0, %v733
    %v735 = vpop.f32.mrb[0].mxu0
    %v736 = vadd.f32 0.0, %v735
    %737 = vmatprep.mubr.f32.mxu0 0.0
    %738 = vmatmul.mubr.f32.gmra.mrb[0].mxu0 %v665
    %v739 = vpop.f32.mrb[0].mxu0
    %v740 = vadd.f32 0.0, %v739
    %v741 = vpop.f32.mrb[0].mxu0
    %v742 = vadd.f32 0.0, %v741
    %743 = vdwg.mxu0
    %v744 = vld [vmem:[%s7] sm:$0xff]
    %v745 = vld [vmem:[%s7 + $0x8] sm:$0xff]
    %v746 = vld [vmem:[%s7 + $0x10] sm:$0xff]
    %v747 = vld [vmem:[%s7 + $0x18] sm:$0xff]
    %v748 = vld [vmem:[%s7 + $0x20] sm:$0xff]
    %v749 = vld [vmem:[%s7 + $0x28] sm:$0xff]
    %v750 = vld [vmem:[%s7 + $0x30] sm:$0xff]
    %v751 = vld [vmem:[%s7 + $0x38] sm:$0xff]
    %v753 = vsel %vm62, %v572, 0
    %v756 = vsel %vm62, %v648, 0
    %758 = vmatprep.subr.mxu0 %v745
    %759 = vmatpush1.msra.mxu0 %v744
    %760 = vmatprep.subr.mxu0 %v747
    %761 = vmatpush1.msra.mxu0 %v746
    %762 = vmatprep.subr.mxu0 %v749
    %763 = vmatpush1.msra.mxu0 %v748
    %764 = vmatprep.subr.mxu0 %v751
    %765 = vmatpush1.msra.mxu0 %v750
    %766 = vmatprep.subr.mxu0 0.0
    %767 = vmatpush1.msra.mxu0 0.0
    %768 = vmatprep.subr.mxu0 0.0
    %769 = vmatpush1.msra.mxu0 0.0
    %770 = vmatprep.subr.mxu0 0.0
    %771 = vmatpush1.msra.mxu0 0.0
    %772 = vmatprep.subr.mxu0 0.0
    %773 = vmatpush1.msra.mxu0 0.0
    %774 = vmatprep.subr.mxu0 0.0
    %775 = vmatpush1.msra.mxu0 0.0
    %776 = vmatprep.subr.mxu0 0.0
    %777 = vmatpush1.msra.mxu0 0.0
    %778 = vmatprep.subr.mxu0 0.0
    %779 = vmatpush1.msra.mxu0 0.0
    %780 = vmatprep.subr.mxu0 0.0
    %781 = vmatpush1.msra.mxu0 0.0
    %782 = vmatprep.subr.mxu0 0.0
    %783 = vmatpush1.msra.mxu0 0.0
    %784 = vmatprep.subr.mxu0 0.0
    %785 = vmatpush1.msra.mxu0 0.0
    %786 = vmatprep.subr.mxu0 0.0
    %787 = vmatpush1.msra.mxu0 0.0
    %788 = vmatprep.subr.mxu0 0.0
    %789 = vmatpush1.msra.mxu0 0.0
    %790 = vmatprep.subr.mxu0 0.0
    %791 = vmatpush1.msra.mxu0 0.0
    %792 = vmatprep.subr.mxu0 0.0
    %793 = vmatpush1.msra.mxu0 0.0
    %794 = vmatprep.subr.mxu0 0.0
    %795 = vmatpush1.msra.mxu0 0.0
    %796 = vmatprep.subr.mxu0 0.0
    %797 = vmatpush1.msra.mxu0 0.0
    %798 = vmatprep.subr.mxu0 0.0
    %799 = vmatpush1.msra.mxu0 0.0
    %800 = vmatprep.subr.mxu0 0.0
    %801 = vmatpush1.msra.mxu0 0.0
    %802 = vmatprep.subr.mxu0 0.0
    %803 = vmatpush1.msra.mxu0 0.0
    %804 = vmatprep.subr.mxu0 0.0
    %805 = vmatpush1.msra.mxu0 0.0
    %806 = vmatprep.subr.mxu0 0.0
    %807 = vmatpush1.msra.mxu0 0.0
    %808 = vmatprep.subr.mxu0 0.0
    %809 = vmatpush1.msra.mxu0 0.0
    %810 = vmatprep.subr.mxu0 0.0
    %811 = vmatpush1.msra.mxu0 0.0
    %812 = vmatprep.subr.mxu0 0.0
    %813 = vmatpush1.msra.mxu0 0.0
    %814 = vmatprep.subr.mxu0 0.0
    %815 = vmatpush1.msra.mxu0 0.0
    %816 = vmatprep.subr.mxu0 0.0
    %817 = vmatpush1.msra.mxu0 0.0
    %818 = vmatprep.subr.mxu0 0.0
    %819 = vmatpush1.msra.mxu0 0.0
    %820 = vmatprep.subr.mxu0 0.0
    %821 = vmatpush1.msra.mxu0 0.0
    %822 = vmatprep.mubr.f32.mxu0 0.0
    %823 = vmatmul.mubr.f32.gmra.mrb[0].mxu0 %v753
    %v824 = vpop.f32.mrb[0].mxu0
    %v825 = vadd.f32 0.0, %v824
    %v826 = vpop.f32.mrb[0].mxu0
    %v827 = vadd.f32 0.0, %v826
    %828 = vmatprep.mubr.f32.mxu0 0.0
    %829 = vmatmul.mubr.f32.gmra.mrb[0].mxu0 %v756
    %v830 = vpop.f32.mrb[0].mxu0
    %v831 = vadd.f32 0.0, %v830
    %v832 = vpop.f32.mrb[0].mxu0
    %v833 = vadd.f32 0.0, %v832
    %834 = vdwg.mxu0
    %v835 = vmul.f32 %v734, %v825
    %v836 = vmul.f32 %v736, %v827
    %v837 = vmul.f32 %v740, %v831
    %v838 = vmul.f32 %v742, %v833
    %v839 = vld [vmem:[%s8] sm:$0xff]
    %v840 = vld [vmem:[%s8 + $0x8] sm:$0xff]
    %v841 = vld [vmem:[%s8 + $0x10] sm:$0xff]
    %v842 = vld [vmem:[%s8 + $0x18] sm:$0xff]
    %v843 = vld [vmem:[%s8 + $0x20] sm:$0xff]
    %v844 = vld [vmem:[%s8 + $0x28] sm:$0xff]
    %v845 = vld [vmem:[%s8 + $0x30] sm:$0xff]
    %v846 = vld [vmem:[%s8 + $0x38] sm:$0xff]
    %v847 = vld [vmem:[%s8 + $0x40] sm:$0xff]
    %v848 = vld [vmem:[%s8 + $0x48] sm:$0xff]
    %v849 = vld [vmem:[%s8 + $0x50] sm:$0xff]
    %v850 = vld [vmem:[%s8 + $0x58] sm:$0xff]
    %v851 = vld [vmem:[%s8 + $0x60] sm:$0xff]
    %v852 = vld [vmem:[%s8 + $0x68] sm:$0xff]
    %v853 = vld [vmem:[%s8 + $0x70] sm:$0xff]
    %v854 = vld [vmem:[%s8 + $0x78] sm:$0xff]
    %v855 = vld [vmem:[%s8 + $0x80] sm:$0xff]
    %v856 = vld [vmem:[%s8 + $0x88] sm:$0xff]
    %v857 = vld [vmem:[%s8 + $0x90] sm:$0xff]
    %v858 = vld [vmem:[%s8 + $0x98] sm:$0xff]
    %v859 = vld [vmem:[%s8 + $0xa0] sm:$0xff]
    %v860 = vld [vmem:[%s8 + $0xa8] sm:$0xff]
    %v861 = vld [vmem:[%s8 + $0xb0] sm:$0xff]
    %v862 = vld [vmem:[%s8 + $0xb8] sm:$0xff]
    %v863 = vld [vmem:[%s8 + $0xc0] sm:$0xff]
    %v864 = vld [vmem:[%s8 + $0xc8] sm:$0xff]
    %v865 = vld [vmem:[%s8 + $0xd0] sm:$0xff]
    %v866 = vld [vmem:[%s8 + $0xd8] sm:$0xff]
    %v867 = vld [vmem:[%s8 + $0xe0] sm:$0xff]
    %v868 = vld [vmem:[%s8 + $0xe8] sm:$0xff]
    %v869 = vld [vmem:[%s8 + $0xf0] sm:$0xff]
    %v870 = vld [vmem:[%s8 + $0xf8] sm:$0xff]
    %v871 = vld [vmem:[%s9] sm:$0x1]
    %v873 = vlaneseq
    %v874 = vshrl.u32 %v873, 7
    %v875 = vsub.s32 0, %v874
    %v876 = vrot.slane %v871, %v875
    %878 = vmatprep.subr.mxu0 0.0
    %879 = vmatpush1.msra.mxu0 %v839
    %880 = vmatprep.subr.mxu0 0.0
    %881 = vmatpush1.msra.mxu0 %v840
    %882 = vmatprep.subr.mxu0 0.0
    %883 = vmatpush1.msra.mxu0 %v841
    %884 = vmatprep.subr.mxu0 0.0
    %885 = vmatpush1.msra.mxu0 %v842
    %886 = vmatprep.subr.mxu0 0.0
    %887 = vmatpush1.msra.mxu0 %v843
    %888 = vmatprep.subr.mxu0 0.0
    %889 = vmatpush1.msra.mxu0 %v844
    %890 = vmatprep.subr.mxu0 0.0
    %891 = vmatpush1.msra.mxu0 %v845
    %892 = vmatprep.subr.mxu0 0.0
    %893 = vmatpush1.msra.mxu0 %v846
    %894 = vmatprep.subr.mxu0 0.0
    %895 = vmatpush1.msra.mxu0 %v847
    %896 = vmatprep.subr.mxu0 0.0
    %897 = vmatpush1.msra.mxu0 %v848
    %898 = vmatprep.subr.mxu0 0.0
    %899 = vmatpush1.msra.mxu0 %v849
    %900 = vmatprep.subr.mxu0 0.0
    %901 = vmatpush1.msra.mxu0 %v850
    %902 = vmatprep.subr.mxu0 0.0
    %903 = vmatpush1.msra.mxu0 %v851
    %904 = vmatprep.subr.mxu0 0.0
    %905 = vmatpush1.msra.mxu0 %v852
    %906 = vmatprep.subr.mxu0 0.0
    %907 = vmatpush1.msra.mxu0 %v853
    %908 = vmatprep.subr.mxu0 0.0
    %909 = vmatpush1.msra.mxu0 %v854
    %910 = vmatprep.subr.mxu0 0.0
    %911 = vmatpush1.msra.mxu0 %v855
    %912 = vmatprep.subr.mxu0 0.0
    %913 = vmatpush1.msra.mxu0 %v856
    %914 = vmatprep.subr.mxu0 0.0
    %915 = vmatpush1.msra.mxu0 %v857
    %916 = vmatprep.subr.mxu0 0.0
    %917 = vmatpush1.msra.mxu0 %v858
    %918 = vmatprep.subr.mxu0 0.0
    %919 = vmatpush1.msra.mxu0 %v859
    %920 = vmatprep.subr.mxu0 0.0
    %921 = vmatpush1.msra.mxu0 %v860
    %922 = vmatprep.subr.mxu0 0.0
    %923 = vmatpush1.msra.mxu0 %v861
    %924 = vmatprep.subr.mxu0 0.0
    %925 = vmatpush1.msra.mxu0 %v862
    %926 = vmatprep.subr.mxu0 0.0
    %927 = vmatpush1.msra.mxu0 %v863
    %928 = vmatprep.subr.mxu0 0.0
    %929 = vmatpush1.msra.mxu0 %v864
    %930 = vmatprep.subr.mxu0 0.0
    %931 = vmatpush1.msra.mxu0 %v865
    %932 = vmatprep.subr.mxu0 0.0
    %933 = vmatpush1.msra.mxu0 %v866
    %934 = vmatprep.subr.mxu0 0.0
    %935 = vmatpush1.msra.mxu0 %v867
    %936 = vmatprep.subr.mxu0 0.0
    %937 = vmatpush1.msra.mxu0 %v868
    %938 = vmatprep.subr.mxu0 0.0
    %939 = vmatpush1.msra.mxu0 %v869
    %940 = vmatprep.subr.mxu0 0.0
    %941 = vmatpush1.msra.mxu0 %v870
    %942 = vmatprep.mubr.f32.mxu0 %v836
    %943 = vmatmul.mubr.f32.gmra.mrb[0].mxu0 %v835
    %v944 = vpop.f32.mrb[0].mxu0
    %v945 = vadd.f32 %v876, %v944
    %v946 = vpop.f32.mrb[0].mxu0
    %947 = vmatprep.mubr.f32.mxu0 %v838
    %948 = vmatmul.mubr.f32.gmra.mrb[0].mxu0 %v837
    %v949 = vpop.f32.mrb[0].mxu0
    %v950 = vadd.f32 %v876, %v949
    %v951 = vpop.f32.mrb[0].mxu0
    %952 = vdwg.mxu0
    %v953 = vsel %vm392, %v945, -inf
    %954 = vmax.xlane.f32.xlu0 %v953
    %v955 = vpop.xlane.xlu0 %954
    %v956 = vsel %vm392, %v950, -inf
    %957 = vmax.xlane.f32.xlu0 %v956
    %v958 = vpop.xlane.xlu0 %957
    %v959 = vsub.f32 %v945, %v955
    %v960 = vsub.f32 %v950, %v958
    %v961 = vmul.f32 %v959, 1.442695
    %v962 = vpow.pop %v961
    %v963 = vmul.f32 %v960, 1.442695
    %v964 = vpow.pop %v963
    %v965 = vsel %vm392, %v962, 0.0
    %966 = vadd.xlane.f32.xlu0 %v965
    %v967 = vpop.xlane.xlu0 %966
    %v968 = vsel %vm392, %v964, 0.0
    %969 = vadd.xlane.f32.xlu0 %v968
    %v970 = vpop.xlane.xlu0 %969
    %v971 = vlog2.pop %v967
    %v972 = vmul.f32 %v971, 0.6931472
    %v973 = vlog2.pop %v970
    %v974 = vmul.f32 %v973, 0.6931472
    %v975 = vsub.f32 %v959, %v972
    %v976 = vsub.f32 %v960, %v974
    %v977 = vld [vmem:[%s11] sm:$0x3]
    %v978 = vlaneseq
    %v979 = vshrl.u32 %v978, 7
    %v980 = vsub.s32 0, %v979
    %v981 = vrot.slane %v977, %v980
    %983 = vbcast.lane.b32.xlu0 %v981, 256
    %v984 = vpop.permute.xlu0 %983
    %v985 = vlaneseq
    %v986 = vshrl.u32 %v985, 7
    %v987 = vsub.s32 1, %v986
    %v988 = vrot.slane %v977, %v987
    %990 = vbcast.lane.b32.xlu0 %v988, 256
    %v991 = vpop.permute.xlu0 %990
    %vm992 = vcmp.eq.s32.totalorder %v418, %v984
    %vm993 = vcmp.eq.s32.totalorder %v418, %v991
    %v994 = vsel %vm992, 1, 0
    %v995 = vsel %vm993, 1, 0
    %v996 = vcvt.s32.f32 %v994
    %v997 = vcvt.s32.f32 %v995
    %v998 = vmul.f32 %v975, %v996
    %v999 = vmul.f32 %v976, %v997
    %v1000 = vsel %vm392, %v998, 0.0
    %1001 = vadd.xlane.f32.xlu0 %v1000
    %v1002 = vpop.xlane.xlu0 %1001
    %v1003 = vsel %vm392, %v999, 0.0
    %1004 = vadd.xlane.f32.xlu0 %v1003
    %v1005 = vpop.xlane.xlu0 %1004
    %v1006 = vmul.f32 %v1002, %v456
    %v1007 = vmul.f32 %v1005, %v463
    %1010 = vset.pattern.permute.xlu0 0
    %1011 = vperm.xlu0 %1010, %v1006
    %v1012 = vpop.permute.xlu0 %1011
    %1013 = vset.pattern.permute.xlu0 0
    %1014 = vperm.xlu0 %1013, %v1007
    %v1015 = vpop.permute.xlu0 %1014
    %v1016 = vlaneseq
    %v1017 = vshrl.u32 %v1016, 7
    %v1018 = vsub.s32 %v418, %v1017
    %v1019 = vrot.slane %v1012, %v1018
    %v1020 = vlaneseq
    %v1021 = vshrl.u32 %v1020, 7
    %v1022 = vsub.s32 %v418, %v1021
    %v1023 = vrot.slane %v1015, %v1022
    %v1024 = vsel %vm484, %v1023, %v1019
    %v1026 = vsel %vm487, %v1024, 0.0
    %1027 = vadd.xlane.f32.xlu0 %v1026
    %v1028 = vpop.xlane.xlu0 %1027
    %v1029 = vrot.slane %v1028, 4
    %v1030 = vadd.f32 %v1028, %v1029
    %v1031 = vrot.slane %v1030, 2
    %v1032 = vadd.f32 %v1030, %v1031
    %v1033 = vrot.slane %v1032, 1
    %v1034 = vadd.f32 %v1032, %v1033
    %s1035 = vtos %v1034
    %s1036 = ssub.f32 0.0, %s1035
    %s1037 = scalar_lea.smem [#allocation2], 0
    %1038 = sst [smem:[%s1037]] %s498
    %s1039 = scalar_lea.smem [#allocation2], 1
    %1040 = sst [smem:[%s1039]] %s1036
    // Predicated region
    $region54: #{dependency_forward.1} parent=1 // pred_check
      _
    $region55: #{dependency_forward.1} parent=1 // pred_check_branch
      %1042 = sbr.rel (0) target = $region57
    $region56: #{dependency_forward.1} parent=1 // pred_region
      %s1044 = ssub.s32 16, 16
      %1045 = vsyncadd [#allocation3], %s1044
      %s1047 = sshll.u32 %s13, 4
      %s1048 = int_to_ptr.vmem [resolvable:$true] %s1047
      %1050 = dma.smem_to_vmem [#allocation2], 16, %s1048, [#allocation3]
    $region57: #{dependency_forward.1} parent=1 // pred_fallthru
      _
    // Predicated region
    $region58: #{dependency_forward.1} parent=1 // pred_check
      _
    $region59: #{dependency_forward.1} parent=1 // pred_check_branch
      %1052 = sbr.rel (0) target = $region61
    $region60: #{dependency_forward.1} parent=1 // pred_region
      %1053 = dma.done [#allocation3], 16
    $region61: #{dependency_forward.1} parent=1 // pred_fallthru
      _
    %1054 = sfence
    %1055 = vsyncpa [#allocation3], 1

</llo_original>
